<compile_context>
chip_gen: v7x
topology: tpu7x:2x2x1
jax: 0.10.0
libtpu: 0.0.40
codegen_flags: <defaults>
</compile_context>

<pallas_src>
import numpy as np
import jax
import jax.numpy as jnp
from jax.experimental import pallas as pl
from jax.experimental.pallas import tpu as pltpu

# ---------------------------- static configuration ------------------------- #
IN_HW = 16          # input spatial size (H = W)
IN_C = 4            # input channels
CONV_SPEC = [
    # (Cin, Cout, (kh, kw), stride)   -- padding=0, dilation=1
    (4, 8, (4, 4), 2),
    (8, 16, (3, 3), 1),
]
DENSE_HID = [32]
OUT_DIM = 6


def _out_hw(h, k, s):
    return (h - k) // s + 1


def _round_up(x, m):
    return (x + m - 1) // m * m


OH1 = _out_hw(IN_HW, CONV_SPEC[0][2][0], CONV_SPEC[0][3])   # 7
OH2 = _out_hw(OH1, CONV_SPEC[1][2][0], CONV_SPEC[1][3])     # 5
C1 = CONV_SPEC[0][1]                                        # 8
C2 = CONV_SPEC[1][1]                                        # 16
DENSE = DENSE_HID[0]                                        # 32

K1 = IN_HW * IN_HW * IN_C       # 1024  flattened input, (h, w, c) order
N1 = OH1 * OH1 * C1             # 392   conv1 output, (oh, ow, c) order
N2 = OH2 * OH2 * C2             # 400   conv2 output / conv_out_dim
N1_PAD = _round_up(N1, 128)     # 512   lane-dense intermediates
N2_PAD = _round_up(N2, 128)     # 512
D_PAD = _round_up(DENSE, 128)   # 128
H_PAD = 128                     # head cols: [adv(6) | v(1) | zero pad]

TB_MAX = 256                    # batch tile (multiple of 8)


# ------------------------------ fused kernel ------------------------------- #

def _dueling_convnet_kernel(x_ref, w1_ref, b1_ref, w2_ref, b2_ref,
                            wd_ref, bd_ref, wh_ref, bh_ref, o_ref):
    """Whole DuelingConvNet forward for one batch tile: 4 GEMMs + bias/relu."""
    # conv1 + relu (im2col folded into w1)
    a1 = jnp.dot(x_ref[...], w1_ref[...], preferred_element_type=jnp.float32)
    a1 = jnp.maximum(a1 + b1_ref[...], 0.0)                      # (TB, 512) f32
    # conv2 + relu
    a2 = jnp.dot(a1.astype(w2_ref.dtype), w2_ref[...],
                 preferred_element_type=jnp.float32)
    a2 = jnp.maximum(a2 + b2_ref[...], 0.0)                      # (TB, 512) f32
    # dense hidden + relu (NCHW flatten permutation folded into wd)
    h = jnp.dot(a2.astype(wd_ref.dtype), wd_ref[...],
                preferred_element_type=jnp.float32)
    h = jnp.maximum(h + bd_ref[...], 0.0)                        # (TB, 128) f32
    # dueling head: one GEMM producing [adv | v | 0...], Q = v + adv - mean(adv)
    logits = jnp.dot(h.astype(wh_ref.dtype), wh_ref[...],
                     preferred_element_type=jnp.float32) + bh_ref[...]
    adv = logits[:, :OUT_DIM]
    v = logits[:, OUT_DIM:OUT_DIM + 1]
    o_ref[...] = v + adv - jnp.mean(adv, axis=-1, keepdims=True)


# ------------------------- init-time weight packing ------------------------ #

def _pack_conv_gemm(w, stride, h_in, w_in, cin, k_rows, n_cols):
    """PyTorch (Cout,Cin,kh,kw) conv -> dense (k_rows, n_cols) GEMM weight.

    Row index = input flatten (h, w, cin); col index = output flatten
    (oh, ow, cout). Extra rows/cols (padding to 128 multiples) stay zero.
    """
    cout, cin_w, kh, kw = w.shape
    assert cin_w == cin
    oh = (h_in - kh) // stride + 1
    ow = (w_in - kw) // stride + 1
    wt = np.asarray(w, np.float32)
    mat = np.zeros((k_rows, n_cols), np.float32)
    for i in range(kh):
        for j in range(kw):
            blk = wt[:, :, i, j].T                       # (cin, cout)
            for r in range(oh):
                hin = stride * r + i
                for q in range(ow):
                    win = stride * q + j
                    row0 = (hin * w_in + win) * cin
                    col0 = (r * ow + q) * cout
                    mat[row0:row0 + cin, col0:col0 + cout] = blk
    return mat


def pack_params(raw, mxu_dtype=jnp.bfloat16):
    """One-time layout work: conv->GEMM Toeplitz slabs, NCHW-flatten permute of
    the first dense layer, fused [adv|v] head, all zero-padded to lane-dense
    widths.  MXU operands are bf16; biases stay f32."""
    (w1c, b1c, s1), (w2c, b2c, s2) = raw["conv"]
    wd, bd = raw["dense"][0]
    wv, bv = raw["v"]
    wa, ba = raw["adv"]

    w1 = _pack_conv_gemm(np.asarray(w1c), s1, IN_HW, IN_HW, IN_C, K1, N1_PAD)
    b1 = np.zeros((1, N1_PAD), np.float32)
    b1[0, :N1] = np.tile(np.asarray(b1c, np.float32), OH1 * OH1)

    w2 = _pack_conv_gemm(np.asarray(w2c), s2, OH1, OH1, C1, N1_PAD, N2_PAD)
    b2 = np.zeros((1, N2_PAD), np.float32)
    b2[0, :N2] = np.tile(np.asarray(b2c, np.float32), OH2 * OH2)

    # first dense weight: permute rows from PyTorch NCHW flatten (c, oh, ow)
    # to the (oh, ow, c) order produced by the packed conv GEMMs.
    wd_p = (np.asarray(wd, np.float32)
            .reshape(C2, OH2, OH2, DENSE)
            .transpose(1, 2, 0, 3)
            .reshape(N2, DENSE))
    wdf = np.zeros((N2_PAD, D_PAD), np.float32)
    wdf[:N2, :DENSE] = wd_p
    bdf = np.zeros((1, D_PAD), np.float32)
    bdf[0, :DENSE] = np.asarray(bd, np.float32)

    # dueling head fused as [advantage | value | zero pad]
    whf = np.zeros((D_PAD, H_PAD), np.float32)
    whf[:DENSE, :OUT_DIM] = np.asarray(wa, np.float32)
    whf[:DENSE, OUT_DIM] = np.asarray(wv, np.float32)[:, 0]
    bhf = np.zeros((1, H_PAD), np.float32)
    bhf[0, :OUT_DIM] = np.asarray(ba, np.float32)
    bhf[0, OUT_DIM] = np.asarray(bv, np.float32)[0]

    return {
        "w1": jnp.asarray(w1, mxu_dtype), "b1": jnp.asarray(b1),
        "w2": jnp.asarray(w2, mxu_dtype), "b2": jnp.asarray(b2),
        "wd": jnp.asarray(wdf, mxu_dtype), "bd": jnp.asarray(bdf),
        "wh": jnp.asarray(whf, mxu_dtype), "bh": jnp.asarray(bhf),
    }


def init_params(key):
    """Raw (PyTorch-layout) parameters + the pre-packed tensors the kernel eats."""
    raw = {"conv": [], "dense": []}
    for (cin, cout, (kh, kw), stride) in CONV_SPEC:
        key, k1, k2 = jax.random.split(key, 3)
        scale = 1.0 / np.sqrt(cin * kh * kw)
        w = jax.random.uniform(k1, (cout, cin, kh, kw), jnp.float32, -scale, scale)
        b = jax.random.uniform(k2, (cout,), jnp.float32, -scale, scale)
        raw["conv"].append((w, b, stride))

    dims = [N2] + DENSE_HID
    for din, dout in zip(dims[:-1], dims[1:]):
        key, k1, k2 = jax.random.split(key, 3)
        scale = 1.0 / np.sqrt(din)
        w = jax.random.uniform(k1, (din, dout), jnp.float32, -scale, scale)
        b = jax.random.uniform(k2, (dout,), jnp.float32, -scale, scale)
        raw["dense"].append((w, b))

    tail_in = DENSE_HID[-1]
    key, k1, k2, k3, k4 = jax.random.split(key, 5)
    scale = 1.0 / np.sqrt(tail_in)
    raw["v"] = (jax.random.uniform(k1, (tail_in, 1), jnp.float32, -scale, scale),
                jax.random.uniform(k2, (1,), jnp.float32, -scale, scale))
    raw["adv"] = (jax.random.uniform(k3, (tail_in, OUT_DIM), jnp.float32, -scale, scale),
                  jax.random.uniform(k4, (OUT_DIM,), jnp.float32, -scale, scale))
    return raw, pack_params(raw)


# --------------------------------- wrapper --------------------------------- #

@jax.jit
def dueling_convnet_forward(x_nhwc, packed):
    """x_nhwc: (B, H, W, C) -- exactly what the PyTorch module's forward()
    receives (its NHWC->NCHW permute and the NCHW flatten are folded into the
    packed weights)."""
    if x_nhwc.ndim == 3:                       # single (H, W, C) example
        x_nhwc = x_nhwc[None]
    b = x_nhwc.shape[0]
    tb = min(TB_MAX, _round_up(b, 8))
    bp = _round_up(b, tb)

    # (h, w, c) flatten is contiguous for NHWC input: free reshape + bf16 cast.
    x = x_nhwc.reshape(b, K1).astype(packed["w1"].dtype)
    if bp != b:
        x = jnp.pad(x, ((0, bp - b), (0, 0)))

    weight_args = (packed["w1"], packed["b1"], packed["w2"], packed["b2"],
                   packed["wd"], packed["bd"], packed["wh"], packed["bh"])
    weight_specs = [pl.BlockSpec(w.shape, lambda i: (0, 0)) for w in weight_args]

    flops = 2 * bp * (K1 * N1_PAD + N1_PAD * N2_PAD + N2_PAD * D_PAD + D_PAD * H_PAD)
    bytes_accessed = (bp * K1 * x.dtype.itemsize
                      + sum(int(w.size) * w.dtype.itemsize for w in weight_args)
                      + bp * OUT_DIM * 4)

    out = pl.pallas_call(
        _dueling_convnet_kernel,
        out_shape=jax.ShapeDtypeStruct((bp, OUT_DIM), jnp.float32),
        grid=(bp // tb,),
        in_specs=[pl.BlockSpec((tb, K1), lambda i: (i, 0))] + weight_specs,
        out_specs=pl.BlockSpec((tb, OUT_DIM), lambda i: (i, 0)),
        compiler_params=pltpu.CompilerParams(
            dimension_semantics=("parallel",)),
        cost_estimate=pl.CostEstimate(flops=flops, transcendentals=0,
                                      bytes_accessed=bytes_accessed),
    )(x, *weight_args)
    return out[:b]


# ------------------------- pure-JAX reference checks ------------------------ #

def reference_packed(x_nhwc, packed):
    """Same packed-GEMM math as the kernel (same bf16 operands), via XLA."""
    b = x_nhwc.shape[0]
    xb = x_nhwc.reshape(b, K1).astype(packed["w1"].dtype)
    a1 = jnp.maximum(jnp.dot(xb, packed["w1"],
                             preferred_element_type=jnp.float32) + packed["b1"], 0.0)
    a2 = jnp.maximum(jnp.dot(a1.astype(packed["w2"].dtype), packed["w2"],
                             preferred_element_type=jnp.float32) + packed["b2"], 0.0)
    h = jnp.maximum(jnp.dot(a2.astype(packed["wd"].dtype), packed["wd"],
                            preferred_element_type=jnp.float32) + packed["bd"], 0.0)
    logits = jnp.dot(h.astype(packed["wh"].dtype), packed["wh"],
                     preferred_element_type=jnp.float32) + packed["bh"]
    adv = logits[:, :OUT_DIM]
    v = logits[:, OUT_DIM:OUT_DIM + 1]
    return v + adv - jnp.mean(adv, axis=-1, keepdims=True)


def reference_forward(x_nhwc, raw):
    """Exact f32 conv/dense/dueling forward from the raw PyTorch-layout params."""
    x = jnp.transpose(x_nhwc.astype(jnp.float32), (0, 3, 1, 2))      # NCHW
    for (w, b, stride) in raw["conv"]:
        x = jax.lax.conv_general_dilated(
            x, w, window_strides=(stride, stride), padding="VALID",
            dimension_numbers=("NCHW", "OIHW", "NCHW"))
        x = jnp.maximum(x + b.reshape(1, -1, 1, 1), 0.0)
    x = x.reshape(x.shape[0], -1)                                    # NCHW flatten
    for (w, b) in raw["dense"]:
        x = jnp.maximum(x @ w + b, 0.0)
    wv, bv = raw["v"]
    wa, ba = raw["adv"]
    v = x @ wv + bv
    adv = x @ wa + ba
    return v + adv - jnp.mean(adv, axis=-1, keepdims=True)


if __name__ == "__main__":
    key = jax.random.PRNGKey(0)
    kx, kp = jax.random.split(key)
    x = jax.random.uniform(kx, (2, IN_HW, IN_HW, IN_C), jnp.float32)  # NHWC
    raw, packed = init_params(kp)

    q = dueling_convnet_forward(x, packed)
    jax.block_until_ready(q)
    assert q.shape == (2, OUT_DIM), q.shape

    # tight check: identical packed-GEMM math (same bf16 operands) via XLA
    q_packed = reference_packed(x, packed)
    err_pack = float(jnp.max(jnp.abs(q - q_packed)))
    assert err_pack < 2e-3, f"packed-math mismatch: {err_pack}"

    # sanity check: true f32 conv/dense forward (tolerance covers bf16 operands)
    q_ref = reference_forward(x, raw)
    err_ref = float(jnp.max(jnp.abs(q - q_ref)))
    assert err_ref < 3e-2, f"f32 reference mismatch: {err_ref}"

    print("KERNEL_OK")
</pallas_src>

<mosaic_0001>
module attributes {stable_mosaic.version = 11 : i64} {
  func.func @_dueling_convnet_kernel(%arg0: i32, %arg1: memref<8x1024xbf16, #tpu.memory_space<vmem>>, %arg2: memref<1024x512xbf16, #tpu.memory_space<vmem>>, %arg3: memref<1x512xf32, #tpu.memory_space<vmem>>, %arg4: memref<512x512xbf16, #tpu.memory_space<vmem>>, %arg5: memref<1x512xf32, #tpu.memory_space<vmem>>, %arg6: memref<512x128xbf16, #tpu.memory_space<vmem>>, %arg7: memref<1x128xf32, #tpu.memory_space<vmem>>, %arg8: memref<128x128xbf16, #tpu.memory_space<vmem>>, %arg9: memref<1x128xf32, #tpu.memory_space<vmem>>, %arg10: memref<8x6xf32, #tpu.memory_space<vmem>>) attributes {dimension_semantics = [#tpu.dimension_semantics<parallel>], iteration_bounds = array<i64: 1>, scalar_prefetch = 0 : i64, scratch_operands = 0 : i64, tpu.core_type = #tpu.core_type<tc>, window_params = [{transform_indices = @transform_0, window_bounds = array<i64: 8, 1024>}, {pipeline_mode = #tpu.pipeline_mode<synchronous>, transform_indices = @transform_1, window_bounds = array<i64: 1024, 512>}, {pipeline_mode = #tpu.pipeline_mode<synchronous>, transform_indices = @transform_2, window_bounds = array<i64: 1, 512>}, {pipeline_mode = #tpu.pipeline_mode<synchronous>, transform_indices = @transform_3, window_bounds = array<i64: 512, 512>}, {pipeline_mode = #tpu.pipeline_mode<synchronous>, transform_indices = @transform_4, window_bounds = array<i64: 1, 512>}, {pipeline_mode = #tpu.pipeline_mode<synchronous>, transform_indices = @transform_5, window_bounds = array<i64: 512, 128>}, {pipeline_mode = #tpu.pipeline_mode<synchronous>, transform_indices = @transform_6, window_bounds = array<i64: 1, 128>}, {pipeline_mode = #tpu.pipeline_mode<synchronous>, transform_indices = @transform_7, window_bounds = array<i64: 128, 128>}, {pipeline_mode = #tpu.pipeline_mode<synchronous>, transform_indices = @transform_8, window_bounds = array<i64: 1, 128>}, {transform_indices = @transform_9, window_bounds = array<i64: 8, 6>}]} {
    %c0 = arith.constant 0 : index
    %c0_0 = arith.constant 0 : index
    %0 = vector.load %arg1[%c0, %c0_0] : memref<8x1024xbf16, #tpu.memory_space<vmem>>, vector<8x1024xbf16>
    %c0_1 = arith.constant 0 : index
    %c0_2 = arith.constant 0 : index
    %1 = vector.load %arg2[%c0_1, %c0_2] : memref<1024x512xbf16, #tpu.memory_space<vmem>>, vector<1024x512xbf16>
    %cst = arith.constant dense<0.000000e+00> : vector<8x512xf32>
    %2 = tpu.matmul %0, %1, %cst {dimension_numbers = #tpu.dot_dimension_numbers<[1], [0], [0], [1], [0, 0, 1, 1], [], []>} : vector<8x1024xbf16>, vector<1024x512xbf16>, vector<8x512xf32> -> vector<8x512xf32>
    %c0_3 = arith.constant 0 : index
    %c0_4 = arith.constant 0 : index
    %3 = vector.load %arg3[%c0_3, %c0_4] : memref<1x512xf32, #tpu.memory_space<vmem>>, vector<1x512xf32>
    %4 = vector.broadcast %3 : vector<1x512xf32> to vector<8x512xf32>
    %5 = arith.addf %2, %4 : vector<8x512xf32>
    %cst_5 = arith.constant 0.000000e+00 : f32
    %6 = vector.broadcast %cst_5 : f32 to vector<8x512xf32>
    %7 = arith.maximumf %5, %6 : vector<8x512xf32>
    %8 = arith.truncf %7 : vector<8x512xf32> to vector<8x512xbf16>
    %c0_6 = arith.constant 0 : index
    %c0_7 = arith.constant 0 : index
    %9 = vector.load %arg4[%c0_6, %c0_7] : memref<512x512xbf16, #tpu.memory_space<vmem>>, vector<512x512xbf16>
    %cst_8 = arith.constant dense<0.000000e+00> : vector<8x512xf32>
    %10 = tpu.matmul %8, %9, %cst_8 {dimension_numbers = #tpu.dot_dimension_numbers<[1], [0], [0], [1], [0, 0, 1, 1], [], []>} : vector<8x512xbf16>, vector<512x512xbf16>, vector<8x512xf32> -> vector<8x512xf32>
    %c0_9 = arith.constant 0 : index
    %c0_10 = arith.constant 0 : index
    %11 = vector.load %arg5[%c0_9, %c0_10] : memref<1x512xf32, #tpu.memory_space<vmem>>, vector<1x512xf32>
    %12 = vector.broadcast %11 : vector<1x512xf32> to vector<8x512xf32>
    %13 = arith.addf %10, %12 : vector<8x512xf32>
    %cst_11 = arith.constant 0.000000e+00 : f32
    %14 = vector.broadcast %cst_11 : f32 to vector<8x512xf32>
    %15 = arith.maximumf %13, %14 : vector<8x512xf32>
    %16 = arith.truncf %15 : vector<8x512xf32> to vector<8x512xbf16>
    %c0_12 = arith.constant 0 : index
    %c0_13 = arith.constant 0 : index
    %17 = vector.load %arg6[%c0_12, %c0_13] : memref<512x128xbf16, #tpu.memory_space<vmem>>, vector<512x128xbf16>
    %cst_14 = arith.constant dense<0.000000e+00> : vector<8x128xf32>
    %18 = tpu.matmul %16, %17, %cst_14 {dimension_numbers = #tpu.dot_dimension_numbers<[1], [0], [0], [1], [0, 0, 1, 1], [], []>} : vector<8x512xbf16>, vector<512x128xbf16>, vector<8x128xf32> -> vector<8x128xf32>
    %c0_15 = arith.constant 0 : index
    %c0_16 = arith.constant 0 : index
    %19 = vector.load %arg7[%c0_15, %c0_16] : memref<1x128xf32, #tpu.memory_space<vmem>>, vector<1x128xf32>
    %20 = vector.broadcast %19 : vector<1x128xf32> to vector<8x128xf32>
    %21 = arith.addf %18, %20 : vector<8x128xf32>
    %cst_17 = arith.constant 0.000000e+00 : f32
    %22 = vector.broadcast %cst_17 : f32 to vector<8x128xf32>
    %23 = arith.maximumf %21, %22 : vector<8x128xf32>
    %24 = arith.truncf %23 : vector<8x128xf32> to vector<8x128xbf16>
    %c0_18 = arith.constant 0 : index
    %c0_19 = arith.constant 0 : index
    %25 = vector.load %arg8[%c0_18, %c0_19] : memref<128x128xbf16, #tpu.memory_space<vmem>>, vector<128x128xbf16>
    %cst_20 = arith.constant dense<0.000000e+00> : vector<8x128xf32>
    %26 = tpu.matmul %24, %25, %cst_20 {dimension_numbers = #tpu.dot_dimension_numbers<[1], [0], [0], [1], [0, 0, 1, 1], [], []>} : vector<8x128xbf16>, vector<128x128xbf16>, vector<8x128xf32> -> vector<8x128xf32>
    %c0_21 = arith.constant 0 : index
    %c0_22 = arith.constant 0 : index
    %27 = vector.load %arg9[%c0_21, %c0_22] : memref<1x128xf32, #tpu.memory_space<vmem>>, vector<1x128xf32>
    %28 = vector.broadcast %27 : vector<1x128xf32> to vector<8x128xf32>
    %29 = arith.addf %26, %28 : vector<8x128xf32>
    %30 = vector.extract_strided_slice %29 {offsets = [0, 0], sizes = [8, 6], strides = [1, 1]} : vector<8x128xf32> to vector<8x6xf32>
    %31 = vector.extract_strided_slice %29 {offsets = [0, 6], sizes = [8, 1], strides = [1, 1]} : vector<8x128xf32> to vector<8x1xf32>
    %32 = vector.broadcast %31 : vector<8x1xf32> to vector<8x6xf32>
    %33 = arith.addf %32, %30 : vector<8x6xf32>
    %cst_23 = arith.constant dense<0.000000e+00> : vector<8xf32>
    %34 = vector.multi_reduction <add>, %30, %cst_23 [1] : vector<8x6xf32> to vector<8xf32>
    %35 = vector.shape_cast %34 : vector<8xf32> to vector<8x1xf32>
    %cst_24 = arith.constant 6.000000e+00 : f32
    %36 = vector.broadcast %cst_24 : f32 to vector<8x1xf32>
    %37 = arith.divf %35, %36 : vector<8x1xf32>
    %38 = vector.broadcast %37 : vector<8x1xf32> to vector<8x6xf32>
    %39 = arith.subf %33, %38 : vector<8x6xf32>
    %c0_25 = arith.constant 0 : index
    %c0_26 = arith.constant 0 : index
    %40 = vector.load %arg10[%c0_25, %c0_26] : memref<8x6xf32, #tpu.memory_space<vmem>>, vector<8x6xf32>
    tpu.vector_store %arg10[%c0_25, %c0_26], %39 {strides = array<i32>} : memref<8x6xf32, #tpu.memory_space<vmem>>, vector<8x6xf32>,
    return
  }
  func.func @transform_0(%arg0: i32) -> (i32, i32) {
    %c0_i32 = arith.constant 0 : i32
    %c0_i32_0 = arith.constant 0 : i32
    return %arg0, %c0_i32 : i32, i32
  }
  func.func @transform_1(%arg0: i32) -> (i32, i32) {
    %c0_i32 = arith.constant 0 : i32
    %c0_i32_0 = arith.constant 0 : i32
    %c0_i32_1 = arith.constant 0 : i32
    return %c0_i32, %c0_i32_0 : i32, i32
  }
  func.func @transform_2(%arg0: i32) -> (i32, i32) {
    %c0_i32 = arith.constant 0 : i32
    %c0_i32_0 = arith.constant 0 : i32
    %c0_i32_1 = arith.constant 0 : i32
    return %c0_i32, %c0_i32_0 : i32, i32
  }
  func.func @transform_3(%arg0: i32) -> (i32, i32) {
    %c0_i32 = arith.constant 0 : i32
    %c0_i32_0 = arith.constant 0 : i32
    %c0_i32_1 = arith.constant 0 : i32
    return %c0_i32, %c0_i32_0 : i32, i32
  }
  func.func @transform_4(%arg0: i32) -> (i32, i32) {
    %c0_i32 = arith.constant 0 : i32
    %c0_i32_0 = arith.constant 0 : i32
    %c0_i32_1 = arith.constant 0 : i32
    return %c0_i32, %c0_i32_0 : i32, i32
  }
  func.func @transform_5(%arg0: i32) -> (i32, i32) {
    %c0_i32 = arith.constant 0 : i32
    %c0_i32_0 = arith.constant 0 : i32
    %c0_i32_1 = arith.constant 0 : i32
    return %c0_i32, %c0_i32_0 : i32, i32
  }
  func.func @transform_6(%arg0: i32) -> (i32, i32) {
    %c0_i32 = arith.constant 0 : i32
    %c0_i32_0 = arith.constant 0 : i32
    %c0_i32_1 = arith.constant 0 : i32
    return %c0_i32, %c0_i32_0 : i32, i32
  }
  func.func @transform_7(%arg0: i32) -> (i32, i32) {
    %c0_i32 = arith.constant 0 : i32
    %c0_i32_0 = arith.constant 0 : i32
    %c0_i32_1 = arith.constant 0 : i32
    return %c0_i32, %c0_i32_0 : i32, i32
  }
  func.func @transform_8(%arg0: i32) -> (i32, i32) {
    %c0_i32 = arith.constant 0 : i32
    %c0_i32_0 = arith.constant 0 : i32
    %c0_i32_1 = arith.constant 0 : i32
    return %c0_i32, %c0_i32_0 : i32, i32
  }
  func.func @transform_9(%arg0: i32) -> (i32, i32) {
    %c0_i32 = arith.constant 0 : i32
    %c0_i32_0 = arith.constant 0 : i32
    return %arg0, %c0_i32 : i32, i32
  }
}

</mosaic_0001>

<llo_original>
// kernel: dueling_convnet_forward.1
$region0: #{dueling_convnet_forward.1}
  #allocation0 [shape = 'u32[]', space=smem, size = 0x4, offset = 0x4, fixed_abs, tag = 'smem constant byte address 0x4 - core index']
  #allocation1 [shape = 'u32[144,128]{1,0:T(1,128)}', space=vmem, size = 0x12000, scoped, tag = 'internal scratch']
  %s0 = inlined_call_operand.vmem [shape: bf16[8,1024], index: 0, kind: input, shape index: {}]
  %s1 = inlined_call_operand.hbm [shape: bf16[1024,512], index: 1, kind: input, shape index: {}]
  %s2 = inlined_call_operand.vmem [shape: f32[1,512], index: 2, kind: input, shape index: {}]
  %s3 = inlined_call_operand.hbm [shape: bf16[512,512], index: 3, kind: input, shape index: {}]
  %s4 = inlined_call_operand.vmem [shape: f32[1,512], index: 4, kind: input, shape index: {}]
  %s5 = inlined_call_operand.vmem [shape: bf16[512,128], index: 5, kind: input, shape index: {}]
  %s6 = inlined_call_operand.vmem [shape: f32[1,128], index: 6, kind: input, shape index: {}]
  %s7 = inlined_call_operand.vmem [shape: bf16[128,128], index: 7, kind: input, shape index: {}]
  %s8 = inlined_call_operand.vmem [shape: f32[1,128], index: 8, kind: input, shape index: {}]
  %s9 = inlined_call_operand.vmem [shape: f32[8,6], index: 9, kind: output, shape index: {}]
  %s10 = sld [smem:[#allocation0]]
  $region54: #{dueling_convnet_forward.1} parent=0
    _
  %s12 = ssub.s32 1, %s10
  %s13 = scalar_select 0, %s12, %s10
  $region1: #{dueling_convnet_forward.1} parent=0
    #allocation2 [shape = 'u8[1048576]{0}', space=vmem, size = 0x100000, scoped, tag = 'input window, operand 1, single buffered']
    #allocation3 [shape = 's32[1]{0}', space=sflag, size = 0x4, scoped, tag = 'scoped memory for dueling_convnet_forward.1']
    #allocation4 [shape = 'u8[524288]{0}', space=vmem, size = 0x80000, scoped, tag = 'input window, operand 3, single buffered']
    #allocation5 [shape = 's32[1]{0}', space=sflag, size = 0x4, scoped, tag = 'scoped memory for dueling_convnet_forward.1']
    %14 = vsyncpa [#allocation3], 0
    %15 = vsyncpa [#allocation5], 0
    // Predicated region
    $region2: #{dueling_convnet_forward.1} parent=1 // pred_check
      _
    $region3: #{dueling_convnet_forward.1} parent=1 // pred_check_branch
      %17 = sbr.rel (0) target = $region5
    $region4: #{dueling_convnet_forward.1} parent=1 // pred_region
      _
    $region5: #{dueling_convnet_forward.1} parent=1 // pred_fallthru
      _
    // Predicated region
    $region6: #{dueling_convnet_forward.1} parent=1 // pred_check
      _
    $region7: #{dueling_convnet_forward.1} parent=1 // pred_check_branch
      %19 = sbr.rel (0) target = $region9
    $region8: #{dueling_convnet_forward.1} parent=1 // pred_region
      %s21 = ssub.s32 32768, 32768
      %22 = vsyncadd [#allocation3], %s21
      %s23 = sshll.u32 [#allocation2], 4
      %s24 = int_to_ptr.vmem [resolvable:$true] %s23
      %29 = dma.hbm_to_vmem [thread:$0]  %s1, 32768, %s24, [#allocation3], 256, 256, 16
    $region9: #{dueling_convnet_forward.1} parent=1 // pred_fallthru
      _
    // Predicated region
    $region10: #{dueling_convnet_forward.1} parent=1 // pred_check
      _
    $region11: #{dueling_convnet_forward.1} parent=1 // pred_check_branch
      %31 = sbr.rel (0) target = $region13
    $region12: #{dueling_convnet_forward.1} parent=1 // pred_region
      _
    $region13: #{dueling_convnet_forward.1} parent=1 // pred_fallthru
      _
    // Predicated region
    $region14: #{dueling_convnet_forward.1} parent=1 // pred_check
      _
    $region15: #{dueling_convnet_forward.1} parent=1 // pred_check_branch
      %33 = sbr.rel (0) target = $region17
    $region16: #{dueling_convnet_forward.1} parent=1 // pred_region
      %s35 = ssub.s32 16384, 16384
      %36 = vsyncadd [#allocation5], %s35
      %s37 = sshll.u32 [#allocation4], 4
      %s38 = int_to_ptr.vmem [resolvable:$true] %s37
      %43 = dma.hbm_to_vmem [thread:$0]  %s3, 16384, %s38, [#allocation5], 256, 256, 16
    $region17: #{dueling_convnet_forward.1} parent=1 // pred_fallthru
      _
    // Predicated region
    $region18: #{dueling_convnet_forward.1} parent=1 // pred_check
      _
    $region19: #{dueling_convnet_forward.1} parent=1 // pred_check_branch
      %45 = sbr.rel (0) target = $region21
    $region20: #{dueling_convnet_forward.1} parent=1 // pred_region
      _
    $region21: #{dueling_convnet_forward.1} parent=1 // pred_fallthru
      _
    // Predicated region
    $region22: #{dueling_convnet_forward.1} parent=1 // pred_check
      _
    $region23: #{dueling_convnet_forward.1} parent=1 // pred_check_branch
      %47 = sbr.rel (0) target = $region25
    $region24: #{dueling_convnet_forward.1} parent=1 // pred_region
      _
    $region25: #{dueling_convnet_forward.1} parent=1 // pred_fallthru
      _
    // Predicated region
    $region26: #{dueling_convnet_forward.1} parent=1 // pred_check
      _
    $region27: #{dueling_convnet_forward.1} parent=1 // pred_check_branch
      %49 = sbr.rel (0) target = $region29
    $region28: #{dueling_convnet_forward.1} parent=1 // pred_region
      _
    $region29: #{dueling_convnet_forward.1} parent=1 // pred_fallthru
      _
    // Predicated region
    $region30: #{dueling_convnet_forward.1} parent=1 // pred_check
      _
    $region31: #{dueling_convnet_forward.1} parent=1 // pred_check_branch
      %51 = sbr.rel (0) target = $region33
    $region32: #{dueling_convnet_forward.1} parent=1 // pred_region
      _
    $region33: #{dueling_convnet_forward.1} parent=1 // pred_fallthru
      _
    // Predicated region
    $region34: #{dueling_convnet_forward.1} parent=1 // pred_check
      _
    $region35: #{dueling_convnet_forward.1} parent=1 // pred_check_branch
      %53 = sbr.rel (0) target = $region37
    $region36: #{dueling_convnet_forward.1} parent=1 // pred_region
      _
    $region37: #{dueling_convnet_forward.1} parent=1 // pred_fallthru
      _
    // Predicated region
    $region38: #{dueling_convnet_forward.1} parent=1 // pred_check
      _
    $region39: #{dueling_convnet_forward.1} parent=1 // pred_check_branch
      %55 = sbr.rel (0) target = $region41
    $region40: #{dueling_convnet_forward.1} parent=1 // pred_region
      %56 = dma.done [#allocation3], 32768
    $region41: #{dueling_convnet_forward.1} parent=1 // pred_fallthru
      _
    // Predicated region
    $region42: #{dueling_convnet_forward.1} parent=1 // pred_check
      _
    $region43: #{dueling_convnet_forward.1} parent=1 // pred_check_branch
      %58 = sbr.rel (0) target = $region45
    $region44: #{dueling_convnet_forward.1} parent=1 // pred_region
      %59 = dma.done [#allocation5], 16384
    $region45: #{dueling_convnet_forward.1} parent=1 // pred_fallthru
      _
    %v61 = vld [vmem:[%s0] sm:$0xff]
    %v62 = vld [vmem:[%s0 + $0x8] sm:$0xff]
    %v63 = vld [vmem:[%s0 + $0x10] sm:$0xff]
    %v64 = vld [vmem:[%s0 + $0x18] sm:$0xff]
    %v65 = vld [vmem:[#allocation2] sm:$0xff]
    %v66 = vld [vmem:[#allocation2 + $0x8] sm:$0xff]
    %v67 = vld [vmem:[#allocation2 + $0x10] sm:$0xff]
    %v68 = vld [vmem:[#allocation2 + $0x18] sm:$0xff]
    %v69 = vld [vmem:[#allocation2 + $0x20] sm:$0xff]
    %v70 = vld [vmem:[#allocation2 + $0x28] sm:$0xff]
    %v71 = vld [vmem:[#allocation2 + $0x30] sm:$0xff]
    %v72 = vld [vmem:[#allocation2 + $0x38] sm:$0xff]
    %v73 = vld [vmem:[#allocation2 + $0x40] sm:$0xff]
    %v74 = vld [vmem:[#allocation2 + $0x48] sm:$0xff]
    %v75 = vld [vmem:[#allocation2 + $0x50] sm:$0xff]
    %v76 = vld [vmem:[#allocation2 + $0x58] sm:$0xff]
    %v77 = vld [vmem:[#allocation2 + $0x60] sm:$0xff]
    %v78 = vld [vmem:[#allocation2 + $0x68] sm:$0xff]
    %v79 = vld [vmem:[#allocation2 + $0x70] sm:$0xff]
    %v80 = vld [vmem:[#allocation2 + $0x78] sm:$0xff]
    %v81 = vld [vmem:[#allocation2 + $0x80] sm:$0xff]
    %v82 = vld [vmem:[#allocation2 + $0x88] sm:$0xff]
    %v83 = vld [vmem:[#allocation2 + $0x90] sm:$0xff]
    %v84 = vld [vmem:[#allocation2 + $0x98] sm:$0xff]
    %v85 = vld [vmem:[#allocation2 + $0xa0] sm:$0xff]
    %v86 = vld [vmem:[#allocation2 + $0xa8] sm:$0xff]
    %v87 = vld [vmem:[#allocation2 + $0xb0] sm:$0xff]
    %v88 = vld [vmem:[#allocation2 + $0xb8] sm:$0xff]
    %v89 = vld [vmem:[#allocation2 + $0xc0] sm:$0xff]
    %v90 = vld [vmem:[#allocation2 + $0xc8] sm:$0xff]
    %v91 = vld [vmem:[#allocation2 + $0xd0] sm:$0xff]
    %v92 = vld [vmem:[#allocation2 + $0xd8] sm:$0xff]
    %v93 = vld [vmem:[#allocation2 + $0xe0] sm:$0xff]
    %v94 = vld [vmem:[#allocation2 + $0xe8] sm:$0xff]
    %v95 = vld [vmem:[#allocation2 + $0xf0] sm:$0xff]
    %v96 = vld [vmem:[#allocation2 + $0xf8] sm:$0xff]
    %v97 = vld [vmem:[#allocation2 + $0x100] sm:$0xff]
    %v98 = vld [vmem:[#allocation2 + $0x108] sm:$0xff]
    %v99 = vld [vmem:[#allocation2 + $0x110] sm:$0xff]
    %v100 = vld [vmem:[#allocation2 + $0x118] sm:$0xff]
    %v101 = vld [vmem:[#allocation2 + $0x120] sm:$0xff]
    %v102 = vld [vmem:[#allocation2 + $0x128] sm:$0xff]
    %v103 = vld [vmem:[#allocation2 + $0x130] sm:$0xff]
    %v104 = vld [vmem:[#allocation2 + $0x138] sm:$0xff]
    %v105 = vld [vmem:[#allocation2 + $0x140] sm:$0xff]
    %v106 = vld [vmem:[#allocation2 + $0x148] sm:$0xff]
    %v107 = vld [vmem:[#allocation2 + $0x150] sm:$0xff]
    %v108 = vld [vmem:[#allocation2 + $0x158] sm:$0xff]
    %v109 = vld [vmem:[#allocation2 + $0x160] sm:$0xff]
    %v110 = vld [vmem:[#allocation2 + $0x168] sm:$0xff]
    %v111 = vld [vmem:[#allocation2 + $0x170] sm:$0xff]
    %v112 = vld [vmem:[#allocation2 + $0x178] sm:$0xff]
    %v113 = vld [vmem:[#allocation2 + $0x180] sm:$0xff]
    %v114 = vld [vmem:[#allocation2 + $0x188] sm:$0xff]
    %v115 = vld [vmem:[#allocation2 + $0x190] sm:$0xff]
    %v116 = vld [vmem:[#allocation2 + $0x198] sm:$0xff]
    %v117 = vld [vmem:[#allocation2 + $0x1a0] sm:$0xff]
    %v118 = vld [vmem:[#allocation2 + $0x1a8] sm:$0xff]
    %v119 = vld [vmem:[#allocation2 + $0x1b0] sm:$0xff]
    %v120 = vld [vmem:[#allocation2 + $0x1b8] sm:$0xff]
    %v121 = vld [vmem:[#allocation2 + $0x1c0] sm:$0xff]
    %v122 = vld [vmem:[#allocation2 + $0x1c8] sm:$0xff]
    %v123 = vld [vmem:[#allocation2 + $0x1d0] sm:$0xff]
    %v124 = vld [vmem:[#allocation2 + $0x1d8] sm:$0xff]
    %v125 = vld [vmem:[#allocation2 + $0x1e0] sm:$0xff]
    %v126 = vld [vmem:[#allocation2 + $0x1e8] sm:$0xff]
    %v127 = vld [vmem:[#allocation2 + $0x1f0] sm:$0xff]
    %v128 = vld [vmem:[#allocation2 + $0x1f8] sm:$0xff]
    %v129 = vld [vmem:[#allocation2 + $0x200] sm:$0xff]
    %v130 = vld [vmem:[#allocation2 + $0x208] sm:$0xff]
    %v131 = vld [vmem:[#allocation2 + $0x210] sm:$0xff]
    %v132 = vld [vmem:[#allocation2 + $0x218] sm:$0xff]
    %v133 = vld [vmem:[#allocation2 + $0x220] sm:$0xff]
    %v134 = vld [vmem:[#allocation2 + $0x228] sm:$0xff]
    %v135 = vld [vmem:[#allocation2 + $0x230] sm:$0xff]
    %v136 = vld [vmem:[#allocation2 + $0x238] sm:$0xff]
    %v137 = vld [vmem:[#allocation2 + $0x240] sm:$0xff]
    %v138 = vld [vmem:[#allocation2 + $0x248] sm:$0xff]
    %v139 = vld [vmem:[#allocation2 + $0x250] sm:$0xff]
    %v140 = vld [vmem:[#allocation2 + $0x258] sm:$0xff]
    %v141 = vld [vmem:[#allocation2 + $0x260] sm:$0xff]
    %v142 = vld [vmem:[#allocation2 + $0x268] sm:$0xff]
    %v143 = vld [vmem:[#allocation2 + $0x270] sm:$0xff]
    %v144 = vld [vmem:[#allocation2 + $0x278] sm:$0xff]
    %v145 = vld [vmem:[#allocation2 + $0x280] sm:$0xff]
    %v146 = vld [vmem:[#allocation2 + $0x288] sm:$0xff]
    %v147 = vld [vmem:[#allocation2 + $0x290] sm:$0xff]
    %v148 = vld [vmem:[#allocation2 + $0x298] sm:$0xff]
    %v149 = vld [vmem:[#allocation2 + $0x2a0] sm:$0xff]
    %v150 = vld [vmem:[#allocation2 + $0x2a8] sm:$0xff]
    %v151 = vld [vmem:[#allocation2 + $0x2b0] sm:$0xff]
    %v152 = vld [vmem:[#allocation2 + $0x2b8] sm:$0xff]
    %v153 = vld [vmem:[#allocation2 + $0x2c0] sm:$0xff]
    %v154 = vld [vmem:[#allocation2 + $0x2c8] sm:$0xff]
    %v155 = vld [vmem:[#allocation2 + $0x2d0] sm:$0xff]
    %v156 = vld [vmem:[#allocation2 + $0x2d8] sm:$0xff]
    %v157 = vld [vmem:[#allocation2 + $0x2e0] sm:$0xff]
    %v158 = vld [vmem:[#allocation2 + $0x2e8] sm:$0xff]
    %v159 = vld [vmem:[#allocation2 + $0x2f0] sm:$0xff]
    %v160 = vld [vmem:[#allocation2 + $0x2f8] sm:$0xff]
    %v161 = vld [vmem:[#allocation2 + $0x300] sm:$0xff]
    %v162 = vld [vmem:[#allocation2 + $0x308] sm:$0xff]
    %v163 = vld [vmem:[#allocation2 + $0x310] sm:$0xff]
    %v164 = vld [vmem:[#allocation2 + $0x318] sm:$0xff]
    %v165 = vld [vmem:[#allocation2 + $0x320] sm:$0xff]
    %v166 = vld [vmem:[#allocation2 + $0x328] sm:$0xff]
    %v167 = vld [vmem:[#allocation2 + $0x330] sm:$0xff]
    %v168 = vld [vmem:[#allocation2 + $0x338] sm:$0xff]
    %v169 = vld [vmem:[#allocation2 + $0x340] sm:$0xff]
    %v170 = vld [vmem:[#allocation2 + $0x348] sm:$0xff]
    %v171 = vld [vmem:[#allocation2 + $0x350] sm:$0xff]
    %v172 = vld [vmem:[#allocation2 + $0x358] sm:$0xff]
    %v173 = vld [vmem:[#allocation2 + $0x360] sm:$0xff]
    %v174 = vld [vmem:[#allocation2 + $0x368] sm:$0xff]
    %v175 = vld [vmem:[#allocation2 + $0x370] sm:$0xff]
    %v176 = vld [vmem:[#allocation2 + $0x378] sm:$0xff]
    %v177 = vld [vmem:[#allocation2 + $0x380] sm:$0xff]
    %v178 = vld [vmem:[#allocation2 + $0x388] sm:$0xff]
    %v179 = vld [vmem:[#allocation2 + $0x390] sm:$0xff]
    %v180 = vld [vmem:[#allocation2 + $0x398] sm:$0xff]
    %v181 = vld [vmem:[#allocation2 + $0x3a0] sm:$0xff]
    %v182 = vld [vmem:[#allocation2 + $0x3a8] sm:$0xff]
    %v183 = vld [vmem:[#allocation2 + $0x3b0] sm:$0xff]
    %v184 = vld [vmem:[#allocation2 + $0x3b8] sm:$0xff]
    %v185 = vld [vmem:[#allocation2 + $0x3c0] sm:$0xff]
    %v186 = vld [vmem:[#allocation2 + $0x3c8] sm:$0xff]
    %v187 = vld [vmem:[#allocation2 + $0x3d0] sm:$0xff]
    %v188 = vld [vmem:[#allocation2 + $0x3d8] sm:$0xff]
    %v189 = vld [vmem:[#allocation2 + $0x3e0] sm:$0xff]
    %v190 = vld [vmem:[#allocation2 + $0x3e8] sm:$0xff]
    %v191 = vld [vmem:[#allocation2 + $0x3f0] sm:$0xff]
    %v192 = vld [vmem:[#allocation2 + $0x3f8] sm:$0xff]
    %v193 = vld [vmem:[#allocation2 + $0x400] sm:$0xff]
    %v194 = vld [vmem:[#allocation2 + $0x408] sm:$0xff]
    %v195 = vld [vmem:[#allocation2 + $0x410] sm:$0xff]
    %v196 = vld [vmem:[#allocation2 + $0x418] sm:$0xff]
    %v197 = vld [vmem:[#allocation2 + $0x420] sm:$0xff]
    %v198 = vld [vmem:[#allocation2 + $0x428] sm:$0xff]
    %v199 = vld [vmem:[#allocation2 + $0x430] sm:$0xff]
    %v200 = vld [vmem:[#allocation2 + $0x438] sm:$0xff]
    %v201 = vld [vmem:[#allocation2 + $0x440] sm:$0xff]
    %v202 = vld [vmem:[#allocation2 + $0x448] sm:$0xff]
    %v203 = vld [vmem:[#allocation2 + $0x450] sm:$0xff]
    %v204 = vld [vmem:[#allocation2 + $0x458] sm:$0xff]
    %v205 = vld [vmem:[#allocation2 + $0x460] sm:$0xff]
    %v206 = vld [vmem:[#allocation2 + $0x468] sm:$0xff]
    %v207 = vld [vmem:[#allocation2 + $0x470] sm:$0xff]
    %v208 = vld [vmem:[#allocation2 + $0x478] sm:$0xff]
    %v209 = vld [vmem:[#allocation2 + $0x480] sm:$0xff]
    %v210 = vld [vmem:[#allocation2 + $0x488] sm:$0xff]
    %v211 = vld [vmem:[#allocation2 + $0x490] sm:$0xff]
    %v212 = vld [vmem:[#allocation2 + $0x498] sm:$0xff]
    %v213 = vld [vmem:[#allocation2 + $0x4a0] sm:$0xff]
    %v214 = vld [vmem:[#allocation2 + $0x4a8] sm:$0xff]
    %v215 = vld [vmem:[#allocation2 + $0x4b0] sm:$0xff]
    %v216 = vld [vmem:[#allocation2 + $0x4b8] sm:$0xff]
    %v217 = vld [vmem:[#allocation2 + $0x4c0] sm:$0xff]
    %v218 = vld [vmem:[#allocation2 + $0x4c8] sm:$0xff]
    %v219 = vld [vmem:[#allocation2 + $0x4d0] sm:$0xff]
    %v220 = vld [vmem:[#allocation2 + $0x4d8] sm:$0xff]
    %v221 = vld [vmem:[#allocation2 + $0x4e0] sm:$0xff]
    %v222 = vld [vmem:[#allocation2 + $0x4e8] sm:$0xff]
    %v223 = vld [vmem:[#allocation2 + $0x4f0] sm:$0xff]
    %v224 = vld [vmem:[#allocation2 + $0x4f8] sm:$0xff]
    %v225 = vld [vmem:[#allocation2 + $0x500] sm:$0xff]
    %v226 = vld [vmem:[#allocation2 + $0x508] sm:$0xff]
    %v227 = vld [vmem:[#allocation2 + $0x510] sm:$0xff]
    %v228 = vld [vmem:[#allocation2 + $0x518] sm:$0xff]
    %v229 = vld [vmem:[#allocation2 + $0x520] sm:$0xff]
    %v230 = vld [vmem:[#allocation2 + $0x528] sm:$0xff]
    %v231 = vld [vmem:[#allocation2 + $0x530] sm:$0xff]
    %v232 = vld [vmem:[#allocation2 + $0x538] sm:$0xff]
    %v233 = vld [vmem:[#allocation2 + $0x540] sm:$0xff]
    %v234 = vld [vmem:[#allocation2 + $0x548] sm:$0xff]
    %v235 = vld [vmem:[#allocation2 + $0x550] sm:$0xff]
    %v236 = vld [vmem:[#allocation2 + $0x558] sm:$0xff]
    %v237 = vld [vmem:[#allocation2 + $0x560] sm:$0xff]
    %v238 = vld [vmem:[#allocation2 + $0x568] sm:$0xff]
    %v239 = vld [vmem:[#allocation2 + $0x570] sm:$0xff]
    %v240 = vld [vmem:[#allocation2 + $0x578] sm:$0xff]
    %v241 = vld [vmem:[#allocation2 + $0x580] sm:$0xff]
    %v242 = vld [vmem:[#allocation2 + $0x588] sm:$0xff]
    %v243 = vld [vmem:[#allocation2 + $0x590] sm:$0xff]
    %v244 = vld [vmem:[#allocation2 + $0x598] sm:$0xff]
    %v245 = vld [vmem:[#allocation2 + $0x5a0] sm:$0xff]
    %v246 = vld [vmem:[#allocation2 + $0x5a8] sm:$0xff]
    %v247 = vld [vmem:[#allocation2 + $0x5b0] sm:$0xff]
    %v248 = vld [vmem:[#allocation2 + $0x5b8] sm:$0xff]
    %v249 = vld [vmem:[#allocation2 + $0x5c0] sm:$0xff]
    %v250 = vld [vmem:[#allocation2 + $0x5c8] sm:$0xff]
    %v251 = vld [vmem:[#allocation2 + $0x5d0] sm:$0xff]
    %v252 = vld [vmem:[#allocation2 + $0x5d8] sm:$0xff]
    %v253 = vld [vmem:[#allocation2 + $0x5e0] sm:$0xff]
    %v254 = vld [vmem:[#allocation2 + $0x5e8] sm:$0xff]
    %v255 = vld [vmem:[#allocation2 + $0x5f0] sm:$0xff]
    %v256 = vld [vmem:[#allocation2 + $0x5f8] sm:$0xff]
    %v257 = vld [vmem:[#allocation2 + $0x600] sm:$0xff]
    %v258 = vld [vmem:[#allocation2 + $0x608] sm:$0xff]
    %v259 = vld [vmem:[#allocation2 + $0x610] sm:$0xff]
    %v260 = vld [vmem:[#allocation2 + $0x618] sm:$0xff]
    %v261 = vld [vmem:[#allocation2 + $0x620] sm:$0xff]
    %v262 = vld [vmem:[#allocation2 + $0x628] sm:$0xff]
    %v263 = vld [vmem:[#allocation2 + $0x630] sm:$0xff]
    %v264 = vld [vmem:[#allocation2 + $0x638] sm:$0xff]
    %v265 = vld [vmem:[#allocation2 + $0x640] sm:$0xff]
    %v266 = vld [vmem:[#allocation2 + $0x648] sm:$0xff]
    %v267 = vld [vmem:[#allocation2 + $0x650] sm:$0xff]
    %v268 = vld [vmem:[#allocation2 + $0x658] sm:$0xff]
    %v269 = vld [vmem:[#allocation2 + $0x660] sm:$0xff]
    %v270 = vld [vmem:[#allocation2 + $0x668] sm:$0xff]
    %v271 = vld [vmem:[#allocation2 + $0x670] sm:$0xff]
    %v272 = vld [vmem:[#allocation2 + $0x678] sm:$0xff]
    %v273 = vld [vmem:[#allocation2 + $0x680] sm:$0xff]
    %v274 = vld [vmem:[#allocation2 + $0x688] sm:$0xff]
    %v275 = vld [vmem:[#allocation2 + $0x690] sm:$0xff]
    %v276 = vld [vmem:[#allocation2 + $0x698] sm:$0xff]
    %v277 = vld [vmem:[#allocation2 + $0x6a0] sm:$0xff]
    %v278 = vld [vmem:[#allocation2 + $0x6a8] sm:$0xff]
    %v279 = vld [vmem:[#allocation2 + $0x6b0] sm:$0xff]
    %v280 = vld [vmem:[#allocation2 + $0x6b8] sm:$0xff]
    %v281 = vld [vmem:[#allocation2 + $0x6c0] sm:$0xff]
    %v282 = vld [vmem:[#allocation2 + $0x6c8] sm:$0xff]
    %v283 = vld [vmem:[#allocation2 + $0x6d0] sm:$0xff]
    %v284 = vld [vmem:[#allocation2 + $0x6d8] sm:$0xff]
    %v285 = vld [vmem:[#allocation2 + $0x6e0] sm:$0xff]
    %v286 = vld [vmem:[#allocation2 + $0x6e8] sm:$0xff]
    %v287 = vld [vmem:[#allocation2 + $0x6f0] sm:$0xff]
    %v288 = vld [vmem:[#allocation2 + $0x6f8] sm:$0xff]
    %v289 = vld [vmem:[#allocation2 + $0x700] sm:$0xff]
    %v290 = vld [vmem:[#allocation2 + $0x708] sm:$0xff]
    %v291 = vld [vmem:[#allocation2 + $0x710] sm:$0xff]
    %v292 = vld [vmem:[#allocation2 + $0x718] sm:$0xff]
    %v293 = vld [vmem:[#allocation2 + $0x720] sm:$0xff]
    %v294 = vld [vmem:[#allocation2 + $0x728] sm:$0xff]
    %v295 = vld [vmem:[#allocation2 + $0x730] sm:$0xff]
    %v296 = vld [vmem:[#allocation2 + $0x738] sm:$0xff]
    %v297 = vld [vmem:[#allocation2 + $0x740] sm:$0xff]
    %v298 = vld [vmem:[#allocation2 + $0x748] sm:$0xff]
    %v299 = vld [vmem:[#allocation2 + $0x750] sm:$0xff]
    %v300 = vld [vmem:[#allocation2 + $0x758] sm:$0xff]
    %v301 = vld [vmem:[#allocation2 + $0x760] sm:$0xff]
    %v302 = vld [vmem:[#allocation2 + $0x768] sm:$0xff]
    %v303 = vld [vmem:[#allocation2 + $0x770] sm:$0xff]
    %v304 = vld [vmem:[#allocation2 + $0x778] sm:$0xff]
    %v305 = vld [vmem:[#allocation2 + $0x780] sm:$0xff]
    %v306 = vld [vmem:[#allocation2 + $0x788] sm:$0xff]
    %v307 = vld [vmem:[#allocation2 + $0x790] sm:$0xff]
    %v308 = vld [vmem:[#allocation2 + $0x798] sm:$0xff]
    %v309 = vld [vmem:[#allocation2 + $0x7a0] sm:$0xff]
    %v310 = vld [vmem:[#allocation2 + $0x7a8] sm:$0xff]
    %v311 = vld [vmem:[#allocation2 + $0x7b0] sm:$0xff]
    %v312 = vld [vmem:[#allocation2 + $0x7b8] sm:$0xff]
    %v313 = vld [vmem:[#allocation2 + $0x7c0] sm:$0xff]
    %v314 = vld [vmem:[#allocation2 + $0x7c8] sm:$0xff]
    %v315 = vld [vmem:[#allocation2 + $0x7d0] sm:$0xff]
    %v316 = vld [vmem:[#allocation2 + $0x7d8] sm:$0xff]
    %v317 = vld [vmem:[#allocation2 + $0x7e0] sm:$0xff]
    %v318 = vld [vmem:[#allocation2 + $0x7e8] sm:$0xff]
    %v319 = vld [vmem:[#allocation2 + $0x7f0] sm:$0xff]
    %v320 = vld [vmem:[#allocation2 + $0x7f8] sm:$0xff]
    %v321 = vld [vmem:[%s2] sm:$0xf]
    %v323 = vlaneseq
    %v324 = vshrl.u32 %v323, 7
    %v325 = vsub.s32 0, %v324
    %v326 = vrot.slane %v321, %v325
    %v327 = vlaneseq
    %v328 = vshrl.u32 %v327, 7
    %v329 = vsub.s32 1, %v328
    %v330 = vrot.slane %v321, %v329
    %v331 = vlaneseq
    %v332 = vshrl.u32 %v331, 7
    %v333 = vsub.s32 2, %v332
    %v334 = vrot.slane %v321, %v333
    %v335 = vlaneseq
    %v336 = vshrl.u32 %v335, 7
    %v337 = vsub.s32 3, %v336
    %v338 = vrot.slane %v321, %v337
    %v347 = vunpack.c.l.b16 %v61
    %v348 = vunpack.c.h.b16 %v61
    %v349 = vunpack.c.l.b16 %v62
    %v350 = vunpack.c.h.b16 %v62
    %v351 = vunpack.c.l.b16 %v63
    %v352 = vunpack.c.h.b16 %v63
    %v353 = vunpack.c.l.b16 %v64
    %v354 = vunpack.c.h.b16 %v64
    %v355 = vpack.c.b16 %v347, %v347
    %v356 = vpack.c.b16 %v348, %v348
    %v357 = vpack.c.b16 %v349, %v349
    %v358 = vpack.c.b16 %v350, %v350
    %v359 = vpack.c.b16 %v351, %v351
    %v360 = vpack.c.b16 %v352, %v352
    %v361 = vpack.c.b16 %v353, %v353
    %v362 = vpack.c.b16 %v354, %v354
    %v627 = vunpack.c.l.b16 %v65
    %v628 = vunpack.c.h.b16 %v65
    %v629 = vunpack.c.l.b16 %v66
    %v630 = vunpack.c.h.b16 %v66
    %v631 = vunpack.c.l.b16 %v67
    %v632 = vunpack.c.h.b16 %v67
    %v633 = vunpack.c.l.b16 %v68
    %v634 = vunpack.c.h.b16 %v68
    %v635 = vunpack.c.l.b16 %v69
    %v636 = vunpack.c.h.b16 %v69
    %v637 = vunpack.c.l.b16 %v70
    %v638 = vunpack.c.h.b16 %v70
    %v639 = vunpack.c.l.b16 %v71
    %v640 = vunpack.c.h.b16 %v71
    %v641 = vunpack.c.l.b16 %v72
    %v642 = vunpack.c.h.b16 %v72
    %v643 = vunpack.c.l.b16 %v73
    %v644 = vunpack.c.h.b16 %v73
    %v645 = vunpack.c.l.b16 %v74
    %v646 = vunpack.c.h.b16 %v74
    %v647 = vunpack.c.l.b16 %v75
    %v648 = vunpack.c.h.b16 %v75
    %v649 = vunpack.c.l.b16 %v76
    %v650 = vunpack.c.h.b16 %v76
    %v651 = vunpack.c.l.b16 %v77
    %v652 = vunpack.c.h.b16 %v77
    %v653 = vunpack.c.l.b16 %v78
    %v654 = vunpack.c.h.b16 %v78
    %v655 = vunpack.c.l.b16 %v79
    %v656 = vunpack.c.h.b16 %v79
    %v657 = vunpack.c.l.b16 %v80
    %v658 = vunpack.c.h.b16 %v80
    %v659 = vunpack.c.l.b16 %v81
    %v660 = vunpack.c.h.b16 %v81
    %v661 = vunpack.c.l.b16 %v82
    %v662 = vunpack.c.h.b16 %v82
    %v663 = vunpack.c.l.b16 %v83
    %v664 = vunpack.c.h.b16 %v83
    %v665 = vunpack.c.l.b16 %v84
    %v666 = vunpack.c.h.b16 %v84
    %v667 = vunpack.c.l.b16 %v85
    %v668 = vunpack.c.h.b16 %v85
    %v669 = vunpack.c.l.b16 %v86
    %v670 = vunpack.c.h.b16 %v86
    %v671 = vunpack.c.l.b16 %v87
    %v672 = vunpack.c.h.b16 %v87
    %v673 = vunpack.c.l.b16 %v88
    %v674 = vunpack.c.h.b16 %v88
    %v675 = vunpack.c.l.b16 %v89
    %v676 = vunpack.c.h.b16 %v89
    %v677 = vunpack.c.l.b16 %v90
    %v678 = vunpack.c.h.b16 %v90
    %v679 = vunpack.c.l.b16 %v91
    %v680 = vunpack.c.h.b16 %v91
    %v681 = vunpack.c.l.b16 %v92
    %v682 = vunpack.c.h.b16 %v92
    %v683 = vunpack.c.l.b16 %v93
    %v684 = vunpack.c.h.b16 %v93
    %v685 = vunpack.c.l.b16 %v94
    %v686 = vunpack.c.h.b16 %v94
    %v687 = vunpack.c.l.b16 %v95
    %v688 = vunpack.c.h.b16 %v95
    %v689 = vunpack.c.l.b16 %v96
    %v690 = vunpack.c.h.b16 %v96
    %v691 = vunpack.c.l.b16 %v97
    %v692 = vunpack.c.h.b16 %v97
    %v693 = vunpack.c.l.b16 %v98
    %v694 = vunpack.c.h.b16 %v98
    %v695 = vunpack.c.l.b16 %v99
    %v696 = vunpack.c.h.b16 %v99
    %v697 = vunpack.c.l.b16 %v100
    %v698 = vunpack.c.h.b16 %v100
    %v699 = vunpack.c.l.b16 %v101
    %v700 = vunpack.c.h.b16 %v101
    %v701 = vunpack.c.l.b16 %v102
    %v702 = vunpack.c.h.b16 %v102
    %v703 = vunpack.c.l.b16 %v103
    %v704 = vunpack.c.h.b16 %v103
    %v705 = vunpack.c.l.b16 %v104
    %v706 = vunpack.c.h.b16 %v104
    %v707 = vunpack.c.l.b16 %v105
    %v708 = vunpack.c.h.b16 %v105
    %v709 = vunpack.c.l.b16 %v106
    %v710 = vunpack.c.h.b16 %v106
    %v711 = vunpack.c.l.b16 %v107
    %v712 = vunpack.c.h.b16 %v107
    %v713 = vunpack.c.l.b16 %v108
    %v714 = vunpack.c.h.b16 %v108
    %v715 = vunpack.c.l.b16 %v109
    %v716 = vunpack.c.h.b16 %v109
    %v717 = vunpack.c.l.b16 %v110
    %v718 = vunpack.c.h.b16 %v110
    %v719 = vunpack.c.l.b16 %v111
    %v720 = vunpack.c.h.b16 %v111
    %v721 = vunpack.c.l.b16 %v112
    %v722 = vunpack.c.h.b16 %v112
    %v723 = vunpack.c.l.b16 %v113
    %v724 = vunpack.c.h.b16 %v113
    %v725 = vunpack.c.l.b16 %v114
    %v726 = vunpack.c.h.b16 %v114
    %v727 = vunpack.c.l.b16 %v115
    %v728 = vunpack.c.h.b16 %v115
    %v729 = vunpack.c.l.b16 %v116
    %v730 = vunpack.c.h.b16 %v116
    %v731 = vunpack.c.l.b16 %v117
    %v732 = vunpack.c.h.b16 %v117
    %v733 = vunpack.c.l.b16 %v118
    %v734 = vunpack.c.h.b16 %v118
    %v735 = vunpack.c.l.b16 %v119
    %v736 = vunpack.c.h.b16 %v119
    %v737 = vunpack.c.l.b16 %v120
    %v738 = vunpack.c.h.b16 %v120
    %v739 = vunpack.c.l.b16 %v121
    %v740 = vunpack.c.h.b16 %v121
    %v741 = vunpack.c.l.b16 %v122
    %v742 = vunpack.c.h.b16 %v122
    %v743 = vunpack.c.l.b16 %v123
    %v744 = vunpack.c.h.b16 %v123
    %v745 = vunpack.c.l.b16 %v124
    %v746 = vunpack.c.h.b16 %v124
    %v747 = vunpack.c.l.b16 %v125
    %v748 = vunpack.c.h.b16 %v125
    %v749 = vunpack.c.l.b16 %v126
    %v750 = vunpack.c.h.b16 %v126
    %v751 = vunpack.c.l.b16 %v127
    %v752 = vunpack.c.h.b16 %v127
    %v753 = vunpack.c.l.b16 %v128
    %v754 = vunpack.c.h.b16 %v128
    %v755 = vunpack.c.l.b16 %v129
    %v756 = vunpack.c.h.b16 %v129
    %v757 = vunpack.c.l.b16 %v130
    %v758 = vunpack.c.h.b16 %v130
    %v759 = vunpack.c.l.b16 %v131
    %v760 = vunpack.c.h.b16 %v131
    %v761 = vunpack.c.l.b16 %v132
    %v762 = vunpack.c.h.b16 %v132
    %v763 = vunpack.c.l.b16 %v133
    %v764 = vunpack.c.h.b16 %v133
    %v765 = vunpack.c.l.b16 %v134
    %v766 = vunpack.c.h.b16 %v134
    %v767 = vunpack.c.l.b16 %v135
    %v768 = vunpack.c.h.b16 %v135
    %v769 = vunpack.c.l.b16 %v136
    %v770 = vunpack.c.h.b16 %v136
    %v771 = vunpack.c.l.b16 %v137
    %v772 = vunpack.c.h.b16 %v137
    %v773 = vunpack.c.l.b16 %v138
    %v774 = vunpack.c.h.b16 %v138
    %v775 = vunpack.c.l.b16 %v139
    %v776 = vunpack.c.h.b16 %v139
    %v777 = vunpack.c.l.b16 %v140
    %v778 = vunpack.c.h.b16 %v140
    %v779 = vunpack.c.l.b16 %v141
    %v780 = vunpack.c.h.b16 %v141
    %v781 = vunpack.c.l.b16 %v142
    %v782 = vunpack.c.h.b16 %v142
    %v783 = vunpack.c.l.b16 %v143
    %v784 = vunpack.c.h.b16 %v143
    %v785 = vunpack.c.l.b16 %v144
    %v786 = vunpack.c.h.b16 %v144
    %v787 = vunpack.c.l.b16 %v145
    %v788 = vunpack.c.h.b16 %v145
    %v789 = vunpack.c.l.b16 %v146
    %v790 = vunpack.c.h.b16 %v146
    %v791 = vunpack.c.l.b16 %v147
    %v792 = vunpack.c.h.b16 %v147
    %v793 = vunpack.c.l.b16 %v148
    %v794 = vunpack.c.h.b16 %v148
    %v795 = vunpack.c.l.b16 %v149
    %v796 = vunpack.c.h.b16 %v149
    %v797 = vunpack.c.l.b16 %v150
    %v798 = vunpack.c.h.b16 %v150
    %v799 = vunpack.c.l.b16 %v151
    %v800 = vunpack.c.h.b16 %v151
    %v801 = vunpack.c.l.b16 %v152
    %v802 = vunpack.c.h.b16 %v152
    %v803 = vunpack.c.l.b16 %v153
    %v804 = vunpack.c.h.b16 %v153
    %v805 = vunpack.c.l.b16 %v154
    %v806 = vunpack.c.h.b16 %v154
    %v807 = vunpack.c.l.b16 %v155
    %v808 = vunpack.c.h.b16 %v155
    %v809 = vunpack.c.l.b16 %v156
    %v810 = vunpack.c.h.b16 %v156
    %v811 = vunpack.c.l.b16 %v157
    %v812 = vunpack.c.h.b16 %v157
    %v813 = vunpack.c.l.b16 %v158
    %v814 = vunpack.c.h.b16 %v158
    %v815 = vunpack.c.l.b16 %v159
    %v816 = vunpack.c.h.b16 %v159
    %v817 = vunpack.c.l.b16 %v160
    %v818 = vunpack.c.h.b16 %v160
    %v819 = vunpack.c.l.b16 %v161
    %v820 = vunpack.c.h.b16 %v161
    %v821 = vunpack.c.l.b16 %v162
    %v822 = vunpack.c.h.b16 %v162
    %v823 = vunpack.c.l.b16 %v163
    %v824 = vunpack.c.h.b16 %v163
    %v825 = vunpack.c.l.b16 %v164
    %v826 = vunpack.c.h.b16 %v164
    %v827 = vunpack.c.l.b16 %v165
    %v828 = vunpack.c.h.b16 %v165
    %v829 = vunpack.c.l.b16 %v166
    %v830 = vunpack.c.h.b16 %v166
    %v831 = vunpack.c.l.b16 %v167
    %v832 = vunpack.c.h.b16 %v167
    %v833 = vunpack.c.l.b16 %v168
    %v834 = vunpack.c.h.b16 %v168
    %v835 = vunpack.c.l.b16 %v169
    %v836 = vunpack.c.h.b16 %v169
    %v837 = vunpack.c.l.b16 %v170
    %v838 = vunpack.c.h.b16 %v170
    %v839 = vunpack.c.l.b16 %v171
    %v840 = vunpack.c.h.b16 %v171
    %v841 = vunpack.c.l.b16 %v172
    %v842 = vunpack.c.h.b16 %v172
    %v843 = vunpack.c.l.b16 %v173
    %v844 = vunpack.c.h.b16 %v173
    %v845 = vunpack.c.l.b16 %v174
    %v846 = vunpack.c.h.b16 %v174
    %v847 = vunpack.c.l.b16 %v175
    %v848 = vunpack.c.h.b16 %v175
    %v849 = vunpack.c.l.b16 %v176
    %v850 = vunpack.c.h.b16 %v176
    %v851 = vunpack.c.l.b16 %v177
    %v852 = vunpack.c.h.b16 %v177
    %v853 = vunpack.c.l.b16 %v178
    %v854 = vunpack.c.h.b16 %v178
    %v855 = vunpack.c.l.b16 %v179
    %v856 = vunpack.c.h.b16 %v179
    %v857 = vunpack.c.l.b16 %v180
    %v858 = vunpack.c.h.b16 %v180
    %v859 = vunpack.c.l.b16 %v181
    %v860 = vunpack.c.h.b16 %v181
    %v861 = vunpack.c.l.b16 %v182
    %v862 = vunpack.c.h.b16 %v182
    %v863 = vunpack.c.l.b16 %v183
    %v864 = vunpack.c.h.b16 %v183
    %v865 = vunpack.c.l.b16 %v184
    %v866 = vunpack.c.h.b16 %v184
    %v867 = vunpack.c.l.b16 %v185
    %v868 = vunpack.c.h.b16 %v185
    %v869 = vunpack.c.l.b16 %v186
    %v870 = vunpack.c.h.b16 %v186
    %v871 = vunpack.c.l.b16 %v187
    %v872 = vunpack.c.h.b16 %v187
    %v873 = vunpack.c.l.b16 %v188
    %v874 = vunpack.c.h.b16 %v188
    %v875 = vunpack.c.l.b16 %v189
    %v876 = vunpack.c.h.b16 %v189
    %v877 = vunpack.c.l.b16 %v190
    %v878 = vunpack.c.h.b16 %v190
    %v879 = vunpack.c.l.b16 %v191
    %v880 = vunpack.c.h.b16 %v191
    %v881 = vunpack.c.l.b16 %v192
    %v882 = vunpack.c.h.b16 %v192
    %v883 = vunpack.c.l.b16 %v193
    %v884 = vunpack.c.h.b16 %v193
    %v885 = vunpack.c.l.b16 %v194
    %v886 = vunpack.c.h.b16 %v194
    %v887 = vunpack.c.l.b16 %v195
    %v888 = vunpack.c.h.b16 %v195
    %v889 = vunpack.c.l.b16 %v196
    %v890 = vunpack.c.h.b16 %v196
    %v891 = vunpack.c.l.b16 %v197
    %v892 = vunpack.c.h.b16 %v197
    %v893 = vunpack.c.l.b16 %v198
    %v894 = vunpack.c.h.b16 %v198
    %v895 = vunpack.c.l.b16 %v199
    %v896 = vunpack.c.h.b16 %v199
    %v897 = vunpack.c.l.b16 %v200
    %v898 = vunpack.c.h.b16 %v200
    %v899 = vunpack.c.l.b16 %v201
    %v900 = vunpack.c.h.b16 %v201
    %v901 = vunpack.c.l.b16 %v202
    %v902 = vunpack.c.h.b16 %v202
    %v903 = vunpack.c.l.b16 %v203
    %v904 = vunpack.c.h.b16 %v203
    %v905 = vunpack.c.l.b16 %v204
    %v906 = vunpack.c.h.b16 %v204
    %v907 = vunpack.c.l.b16 %v205
    %v908 = vunpack.c.h.b16 %v205
    %v909 = vunpack.c.l.b16 %v206
    %v910 = vunpack.c.h.b16 %v206
    %v911 = vunpack.c.l.b16 %v207
    %v912 = vunpack.c.h.b16 %v207
    %v913 = vunpack.c.l.b16 %v208
    %v914 = vunpack.c.h.b16 %v208
    %v915 = vunpack.c.l.b16 %v209
    %v916 = vunpack.c.h.b16 %v209
    %v917 = vunpack.c.l.b16 %v210
    %v918 = vunpack.c.h.b16 %v210
    %v919 = vunpack.c.l.b16 %v211
    %v920 = vunpack.c.h.b16 %v211
    %v921 = vunpack.c.l.b16 %v212
    %v922 = vunpack.c.h.b16 %v212
    %v923 = vunpack.c.l.b16 %v213
    %v924 = vunpack.c.h.b16 %v213
    %v925 = vunpack.c.l.b16 %v214
    %v926 = vunpack.c.h.b16 %v214
    %v927 = vunpack.c.l.b16 %v215
    %v928 = vunpack.c.h.b16 %v215
    %v929 = vunpack.c.l.b16 %v216
    %v930 = vunpack.c.h.b16 %v216
    %v931 = vunpack.c.l.b16 %v217
    %v932 = vunpack.c.h.b16 %v217
    %v933 = vunpack.c.l.b16 %v218
    %v934 = vunpack.c.h.b16 %v218
    %v935 = vunpack.c.l.b16 %v219
    %v936 = vunpack.c.h.b16 %v219
    %v937 = vunpack.c.l.b16 %v220
    %v938 = vunpack.c.h.b16 %v220
    %v939 = vunpack.c.l.b16 %v221
    %v940 = vunpack.c.h.b16 %v221
    %v941 = vunpack.c.l.b16 %v222
    %v942 = vunpack.c.h.b16 %v222
    %v943 = vunpack.c.l.b16 %v223
    %v944 = vunpack.c.h.b16 %v223
    %v945 = vunpack.c.l.b16 %v224
    %v946 = vunpack.c.h.b16 %v224
    %v947 = vunpack.c.l.b16 %v225
    %v948 = vunpack.c.h.b16 %v225
    %v949 = vunpack.c.l.b16 %v226
    %v950 = vunpack.c.h.b16 %v226
    %v951 = vunpack.c.l.b16 %v227
    %v952 = vunpack.c.h.b16 %v227
    %v953 = vunpack.c.l.b16 %v228
    %v954 = vunpack.c.h.b16 %v228
    %v955 = vunpack.c.l.b16 %v229
    %v956 = vunpack.c.h.b16 %v229
    %v957 = vunpack.c.l.b16 %v230
    %v958 = vunpack.c.h.b16 %v230
    %v959 = vunpack.c.l.b16 %v231
    %v960 = vunpack.c.h.b16 %v231
    %v961 = vunpack.c.l.b16 %v232
    %v962 = vunpack.c.h.b16 %v232
    %v963 = vunpack.c.l.b16 %v233
    %v964 = vunpack.c.h.b16 %v233
    %v965 = vunpack.c.l.b16 %v234
    %v966 = vunpack.c.h.b16 %v234
    %v967 = vunpack.c.l.b16 %v235
    %v968 = vunpack.c.h.b16 %v235
    %v969 = vunpack.c.l.b16 %v236
    %v970 = vunpack.c.h.b16 %v236
    %v971 = vunpack.c.l.b16 %v237
    %v972 = vunpack.c.h.b16 %v237
    %v973 = vunpack.c.l.b16 %v238
    %v974 = vunpack.c.h.b16 %v238
    %v975 = vunpack.c.l.b16 %v239
    %v976 = vunpack.c.h.b16 %v239
    %v977 = vunpack.c.l.b16 %v240
    %v978 = vunpack.c.h.b16 %v240
    %v979 = vunpack.c.l.b16 %v241
    %v980 = vunpack.c.h.b16 %v241
    %v981 = vunpack.c.l.b16 %v242
    %v982 = vunpack.c.h.b16 %v242
    %v983 = vunpack.c.l.b16 %v243
    %v984 = vunpack.c.h.b16 %v243
    %v985 = vunpack.c.l.b16 %v244
    %v986 = vunpack.c.h.b16 %v244
    %v987 = vunpack.c.l.b16 %v245
    %v988 = vunpack.c.h.b16 %v245
    %v989 = vunpack.c.l.b16 %v246
    %v990 = vunpack.c.h.b16 %v246
    %v991 = vunpack.c.l.b16 %v247
    %v992 = vunpack.c.h.b16 %v247
    %v993 = vunpack.c.l.b16 %v248
    %v994 = vunpack.c.h.b16 %v248
    %v995 = vunpack.c.l.b16 %v249
    %v996 = vunpack.c.h.b16 %v249
    %v997 = vunpack.c.l.b16 %v250
    %v998 = vunpack.c.h.b16 %v250
    %v999 = vunpack.c.l.b16 %v251
    %v1000 = vunpack.c.h.b16 %v251
    %v1001 = vunpack.c.l.b16 %v252
    %v1002 = vunpack.c.h.b16 %v252
    %v1003 = vunpack.c.l.b16 %v253
    %v1004 = vunpack.c.h.b16 %v253
    %v1005 = vunpack.c.l.b16 %v254
    %v1006 = vunpack.c.h.b16 %v254
    %v1007 = vunpack.c.l.b16 %v255
    %v1008 = vunpack.c.h.b16 %v255
    %v1009 = vunpack.c.l.b16 %v256
    %v1010 = vunpack.c.h.b16 %v256
    %v1011 = vunpack.c.l.b16 %v257
    %v1012 = vunpack.c.h.b16 %v257
    %v1013 = vunpack.c.l.b16 %v258
    %v1014 = vunpack.c.h.b16 %v258
    %v1015 = vunpack.c.l.b16 %v259
    %v1016 = vunpack.c.h.b16 %v259
    %v1017 = vunpack.c.l.b16 %v260
    %v1018 = vunpack.c.h.b16 %v260
    %v1019 = vunpack.c.l.b16 %v261
    %v1020 = vunpack.c.h.b16 %v261
    %v1021 = vunpack.c.l.b16 %v262
    %v1022 = vunpack.c.h.b16 %v262
    %v1023 = vunpack.c.l.b16 %v263
    %v1024 = vunpack.c.h.b16 %v263
    %v1025 = vunpack.c.l.b16 %v264
    %v1026 = vunpack.c.h.b16 %v264
    %v1027 = vunpack.c.l.b16 %v265
    %v1028 = vunpack.c.h.b16 %v265
    %v1029 = vunpack.c.l.b16 %v266
    %v1030 = vunpack.c.h.b16 %v266
    %v1031 = vunpack.c.l.b16 %v267
    %v1032 = vunpack.c.h.b16 %v267
    %v1033 = vunpack.c.l.b16 %v268
    %v1034 = vunpack.c.h.b16 %v268
    %v1035 = vunpack.c.l.b16 %v269
    %v1036 = vunpack.c.h.b16 %v269
    %v1037 = vunpack.c.l.b16 %v270
    %v1038 = vunpack.c.h.b16 %v270
    %v1039 = vunpack.c.l.b16 %v271
    %v1040 = vunpack.c.h.b16 %v271
    %v1041 = vunpack.c.l.b16 %v272
    %v1042 = vunpack.c.h.b16 %v272
    %v1043 = vunpack.c.l.b16 %v273
    %v1044 = vunpack.c.h.b16 %v273
    %v1045 = vunpack.c.l.b16 %v274
    %v1046 = vunpack.c.h.b16 %v274
    %v1047 = vunpack.c.l.b16 %v275
    %v1048 = vunpack.c.h.b16 %v275
    %v1049 = vunpack.c.l.b16 %v276
    %v1050 = vunpack.c.h.b16 %v276
    %v1051 = vunpack.c.l.b16 %v277
    %v1052 = vunpack.c.h.b16 %v277
    %v1053 = vunpack.c.l.b16 %v278
    %v1054 = vunpack.c.h.b16 %v278
    %v1055 = vunpack.c.l.b16 %v279
    %v1056 = vunpack.c.h.b16 %v279
    %v1057 = vunpack.c.l.b16 %v280
    %v1058 = vunpack.c.h.b16 %v280
    %v1059 = vunpack.c.l.b16 %v281
    %v1060 = vunpack.c.h.b16 %v281
    %v1061 = vunpack.c.l.b16 %v282
    %v1062 = vunpack.c.h.b16 %v282
    %v1063 = vunpack.c.l.b16 %v283
    %v1064 = vunpack.c.h.b16 %v283
    %v1065 = vunpack.c.l.b16 %v284
    %v1066 = vunpack.c.h.b16 %v284
    %v1067 = vunpack.c.l.b16 %v285
    %v1068 = vunpack.c.h.b16 %v285
    %v1069 = vunpack.c.l.b16 %v286
    %v1070 = vunpack.c.h.b16 %v286
    %v1071 = vunpack.c.l.b16 %v287
    %v1072 = vunpack.c.h.b16 %v287
    %v1073 = vunpack.c.l.b16 %v288
    %v1074 = vunpack.c.h.b16 %v288
    %v1075 = vunpack.c.l.b16 %v289
    %v1076 = vunpack.c.h.b16 %v289
    %v1077 = vunpack.c.l.b16 %v290
    %v1078 = vunpack.c.h.b16 %v290
    %v1079 = vunpack.c.l.b16 %v291
    %v1080 = vunpack.c.h.b16 %v291
    %v1081 = vunpack.c.l.b16 %v292
    %v1082 = vunpack.c.h.b16 %v292
    %v1083 = vunpack.c.l.b16 %v293
    %v1084 = vunpack.c.h.b16 %v293
    %v1085 = vunpack.c.l.b16 %v294
    %v1086 = vunpack.c.h.b16 %v294
    %v1087 = vunpack.c.l.b16 %v295
    %v1088 = vunpack.c.h.b16 %v295
    %v1089 = vunpack.c.l.b16 %v296
    %v1090 = vunpack.c.h.b16 %v296
    %v1091 = vunpack.c.l.b16 %v297
    %v1092 = vunpack.c.h.b16 %v297
    %v1093 = vunpack.c.l.b16 %v298
    %v1094 = vunpack.c.h.b16 %v298
    %v1095 = vunpack.c.l.b16 %v299
    %v1096 = vunpack.c.h.b16 %v299
    %v1097 = vunpack.c.l.b16 %v300
    %v1098 = vunpack.c.h.b16 %v300
    %v1099 = vunpack.c.l.b16 %v301
    %v1100 = vunpack.c.h.b16 %v301
    %v1101 = vunpack.c.l.b16 %v302
    %v1102 = vunpack.c.h.b16 %v302
    %v1103 = vunpack.c.l.b16 %v303
    %v1104 = vunpack.c.h.b16 %v303
    %v1105 = vunpack.c.l.b16 %v304
    %v1106 = vunpack.c.h.b16 %v304
    %v1107 = vunpack.c.l.b16 %v305
    %v1108 = vunpack.c.h.b16 %v305
    %v1109 = vunpack.c.l.b16 %v306
    %v1110 = vunpack.c.h.b16 %v306
    %v1111 = vunpack.c.l.b16 %v307
    %v1112 = vunpack.c.h.b16 %v307
    %v1113 = vunpack.c.l.b16 %v308
    %v1114 = vunpack.c.h.b16 %v308
    %v1115 = vunpack.c.l.b16 %v309
    %v1116 = vunpack.c.h.b16 %v309
    %v1117 = vunpack.c.l.b16 %v310
    %v1118 = vunpack.c.h.b16 %v310
    %v1119 = vunpack.c.l.b16 %v311
    %v1120 = vunpack.c.h.b16 %v311
    %v1121 = vunpack.c.l.b16 %v312
    %v1122 = vunpack.c.h.b16 %v312
    %v1123 = vunpack.c.l.b16 %v313
    %v1124 = vunpack.c.h.b16 %v313
    %v1125 = vunpack.c.l.b16 %v314
    %v1126 = vunpack.c.h.b16 %v314
    %v1127 = vunpack.c.l.b16 %v315
    %v1128 = vunpack.c.h.b16 %v315
    %v1129 = vunpack.c.l.b16 %v316
    %v1130 = vunpack.c.h.b16 %v316
    %v1131 = vunpack.c.l.b16 %v317
    %v1132 = vunpack.c.h.b16 %v317
    %v1133 = vunpack.c.l.b16 %v318
    %v1134 = vunpack.c.h.b16 %v318
    %v1135 = vunpack.c.l.b16 %v319
    %v1136 = vunpack.c.h.b16 %v319
    %v1137 = vunpack.c.l.b16 %v320
    %v1138 = vunpack.c.h.b16 %v320
    %v1139 = vpack.c.b16 %v631, %v627
    %v1140 = vpack.c.b16 %v632, %v628
    %v1141 = vpack.c.b16 %v633, %v629
    %v1142 = vpack.c.b16 %v634, %v630
    %v1143 = vpack.c.b16 %v639, %v635
    %v1144 = vpack.c.b16 %v640, %v636
    %v1145 = vpack.c.b16 %v641, %v637
    %v1146 = vpack.c.b16 %v642, %v638
    %v1147 = vpack.c.b16 %v647, %v643
    %v1148 = vpack.c.b16 %v648, %v644
    %v1149 = vpack.c.b16 %v649, %v645
    %v1150 = vpack.c.b16 %v650, %v646
    %v1151 = vpack.c.b16 %v655, %v651
    %v1152 = vpack.c.b16 %v656, %v652
    %v1153 = vpack.c.b16 %v657, %v653
    %v1154 = vpack.c.b16 %v658, %v654
    %v1155 = vpack.c.b16 %v663, %v659
    %v1156 = vpack.c.b16 %v664, %v660
    %v1157 = vpack.c.b16 %v665, %v661
    %v1158 = vpack.c.b16 %v666, %v662
    %v1159 = vpack.c.b16 %v671, %v667
    %v1160 = vpack.c.b16 %v672, %v668
    %v1161 = vpack.c.b16 %v673, %v669
    %v1162 = vpack.c.b16 %v674, %v670
    %v1163 = vpack.c.b16 %v679, %v675
    %v1164 = vpack.c.b16 %v680, %v676
    %v1165 = vpack.c.b16 %v681, %v677
    %v1166 = vpack.c.b16 %v682, %v678
    %v1167 = vpack.c.b16 %v687, %v683
    %v1168 = vpack.c.b16 %v688, %v684
    %v1169 = vpack.c.b16 %v689, %v685
    %v1170 = vpack.c.b16 %v690, %v686
    %v1171 = vpack.c.b16 %v695, %v691
    %v1172 = vpack.c.b16 %v696, %v692
    %v1173 = vpack.c.b16 %v697, %v693
    %v1174 = vpack.c.b16 %v698, %v694
    %v1175 = vpack.c.b16 %v703, %v699
    %v1176 = vpack.c.b16 %v704, %v700
    %v1177 = vpack.c.b16 %v705, %v701
    %v1178 = vpack.c.b16 %v706, %v702
    %v1179 = vpack.c.b16 %v711, %v707
    %v1180 = vpack.c.b16 %v712, %v708
    %v1181 = vpack.c.b16 %v713, %v709
    %v1182 = vpack.c.b16 %v714, %v710
    %v1183 = vpack.c.b16 %v719, %v715
    %v1184 = vpack.c.b16 %v720, %v716
    %v1185 = vpack.c.b16 %v721, %v717
    %v1186 = vpack.c.b16 %v722, %v718
    %v1187 = vpack.c.b16 %v727, %v723
    %v1188 = vpack.c.b16 %v728, %v724
    %v1189 = vpack.c.b16 %v729, %v725
    %v1190 = vpack.c.b16 %v730, %v726
    %v1191 = vpack.c.b16 %v735, %v731
    %v1192 = vpack.c.b16 %v736, %v732
    %v1193 = vpack.c.b16 %v737, %v733
    %v1194 = vpack.c.b16 %v738, %v734
    %v1195 = vpack.c.b16 %v743, %v739
    %v1196 = vpack.c.b16 %v744, %v740
    %v1197 = vpack.c.b16 %v745, %v741
    %v1198 = vpack.c.b16 %v746, %v742
    %v1199 = vpack.c.b16 %v751, %v747
    %v1200 = vpack.c.b16 %v752, %v748
    %v1201 = vpack.c.b16 %v753, %v749
    %v1202 = vpack.c.b16 %v754, %v750
    %v1203 = vpack.c.b16 %v759, %v755
    %v1204 = vpack.c.b16 %v760, %v756
    %v1205 = vpack.c.b16 %v761, %v757
    %v1206 = vpack.c.b16 %v762, %v758
    %v1207 = vpack.c.b16 %v767, %v763
    %v1208 = vpack.c.b16 %v768, %v764
    %v1209 = vpack.c.b16 %v769, %v765
    %v1210 = vpack.c.b16 %v770, %v766
    %v1211 = vpack.c.b16 %v775, %v771
    %v1212 = vpack.c.b16 %v776, %v772
    %v1213 = vpack.c.b16 %v777, %v773
    %v1214 = vpack.c.b16 %v778, %v774
    %v1215 = vpack.c.b16 %v783, %v779
    %v1216 = vpack.c.b16 %v784, %v780
    %v1217 = vpack.c.b16 %v785, %v781
    %v1218 = vpack.c.b16 %v786, %v782
    %v1219 = vpack.c.b16 %v791, %v787
    %v1220 = vpack.c.b16 %v792, %v788
    %v1221 = vpack.c.b16 %v793, %v789
    %v1222 = vpack.c.b16 %v794, %v790
    %v1223 = vpack.c.b16 %v799, %v795
    %v1224 = vpack.c.b16 %v800, %v796
    %v1225 = vpack.c.b16 %v801, %v797
    %v1226 = vpack.c.b16 %v802, %v798
    %v1227 = vpack.c.b16 %v807, %v803
    %v1228 = vpack.c.b16 %v808, %v804
    %v1229 = vpack.c.b16 %v809, %v805
    %v1230 = vpack.c.b16 %v810, %v806
    %v1231 = vpack.c.b16 %v815, %v811
    %v1232 = vpack.c.b16 %v816, %v812
    %v1233 = vpack.c.b16 %v817, %v813
    %v1234 = vpack.c.b16 %v818, %v814
    %v1235 = vpack.c.b16 %v823, %v819
    %v1236 = vpack.c.b16 %v824, %v820
    %v1237 = vpack.c.b16 %v825, %v821
    %v1238 = vpack.c.b16 %v826, %v822
    %v1239 = vpack.c.b16 %v831, %v827
    %v1240 = vpack.c.b16 %v832, %v828
    %v1241 = vpack.c.b16 %v833, %v829
    %v1242 = vpack.c.b16 %v834, %v830
    %v1243 = vpack.c.b16 %v839, %v835
    %v1244 = vpack.c.b16 %v840, %v836
    %v1245 = vpack.c.b16 %v841, %v837
    %v1246 = vpack.c.b16 %v842, %v838
    %v1247 = vpack.c.b16 %v847, %v843
    %v1248 = vpack.c.b16 %v848, %v844
    %v1249 = vpack.c.b16 %v849, %v845
    %v1250 = vpack.c.b16 %v850, %v846
    %v1251 = vpack.c.b16 %v855, %v851
    %v1252 = vpack.c.b16 %v856, %v852
    %v1253 = vpack.c.b16 %v857, %v853
    %v1254 = vpack.c.b16 %v858, %v854
    %v1255 = vpack.c.b16 %v863, %v859
    %v1256 = vpack.c.b16 %v864, %v860
    %v1257 = vpack.c.b16 %v865, %v861
    %v1258 = vpack.c.b16 %v866, %v862
    %v1259 = vpack.c.b16 %v871, %v867
    %v1260 = vpack.c.b16 %v872, %v868
    %v1261 = vpack.c.b16 %v873, %v869
    %v1262 = vpack.c.b16 %v874, %v870
    %v1263 = vpack.c.b16 %v879, %v875
    %v1264 = vpack.c.b16 %v880, %v876
    %v1265 = vpack.c.b16 %v881, %v877
    %v1266 = vpack.c.b16 %v882, %v878
    %v1267 = vpack.c.b16 %v887, %v883
    %v1268 = vpack.c.b16 %v888, %v884
    %v1269 = vpack.c.b16 %v889, %v885
    %v1270 = vpack.c.b16 %v890, %v886
    %v1271 = vpack.c.b16 %v895, %v891
    %v1272 = vpack.c.b16 %v896, %v892
    %v1273 = vpack.c.b16 %v897, %v893
    %v1274 = vpack.c.b16 %v898, %v894
    %v1275 = vpack.c.b16 %v903, %v899
    %v1276 = vpack.c.b16 %v904, %v900
    %v1277 = vpack.c.b16 %v905, %v901
    %v1278 = vpack.c.b16 %v906, %v902
    %v1279 = vpack.c.b16 %v911, %v907
    %v1280 = vpack.c.b16 %v912, %v908
    %v1281 = vpack.c.b16 %v913, %v909
    %v1282 = vpack.c.b16 %v914, %v910
    %v1283 = vpack.c.b16 %v919, %v915
    %v1284 = vpack.c.b16 %v920, %v916
    %v1285 = vpack.c.b16 %v921, %v917
    %v1286 = vpack.c.b16 %v922, %v918
    %v1287 = vpack.c.b16 %v927, %v923
    %v1288 = vpack.c.b16 %v928, %v924
    %v1289 = vpack.c.b16 %v929, %v925
    %v1290 = vpack.c.b16 %v930, %v926
    %v1291 = vpack.c.b16 %v935, %v931
    %v1292 = vpack.c.b16 %v936, %v932
    %v1293 = vpack.c.b16 %v937, %v933
    %v1294 = vpack.c.b16 %v938, %v934
    %v1295 = vpack.c.b16 %v943, %v939
    %v1296 = vpack.c.b16 %v944, %v940
    %v1297 = vpack.c.b16 %v945, %v941
    %v1298 = vpack.c.b16 %v946, %v942
    %v1299 = vpack.c.b16 %v951, %v947
    %v1300 = vpack.c.b16 %v952, %v948
    %v1301 = vpack.c.b16 %v953, %v949
    %v1302 = vpack.c.b16 %v954, %v950
    %v1303 = vpack.c.b16 %v959, %v955
    %v1304 = vpack.c.b16 %v960, %v956
    %v1305 = vpack.c.b16 %v961, %v957
    %v1306 = vpack.c.b16 %v962, %v958
    %v1307 = vpack.c.b16 %v967, %v963
    %v1308 = vpack.c.b16 %v968, %v964
    %v1309 = vpack.c.b16 %v969, %v965
    %v1310 = vpack.c.b16 %v970, %v966
    %v1311 = vpack.c.b16 %v975, %v971
    %v1312 = vpack.c.b16 %v976, %v972
    %v1313 = vpack.c.b16 %v977, %v973
    %v1314 = vpack.c.b16 %v978, %v974
    %v1315 = vpack.c.b16 %v983, %v979
    %v1316 = vpack.c.b16 %v984, %v980
    %v1317 = vpack.c.b16 %v985, %v981
    %v1318 = vpack.c.b16 %v986, %v982
    %v1319 = vpack.c.b16 %v991, %v987
    %v1320 = vpack.c.b16 %v992, %v988
    %v1321 = vpack.c.b16 %v993, %v989
    %v1322 = vpack.c.b16 %v994, %v990
    %v1323 = vpack.c.b16 %v999, %v995
    %v1324 = vpack.c.b16 %v1000, %v996
    %v1325 = vpack.c.b16 %v1001, %v997
    %v1326 = vpack.c.b16 %v1002, %v998
    %v1327 = vpack.c.b16 %v1007, %v1003
    %v1328 = vpack.c.b16 %v1008, %v1004
    %v1329 = vpack.c.b16 %v1009, %v1005
    %v1330 = vpack.c.b16 %v1010, %v1006
    %v1331 = vpack.c.b16 %v1015, %v1011
    %v1332 = vpack.c.b16 %v1016, %v1012
    %v1333 = vpack.c.b16 %v1017, %v1013
    %v1334 = vpack.c.b16 %v1018, %v1014
    %v1335 = vpack.c.b16 %v1023, %v1019
    %v1336 = vpack.c.b16 %v1024, %v1020
    %v1337 = vpack.c.b16 %v1025, %v1021
    %v1338 = vpack.c.b16 %v1026, %v1022
    %v1339 = vpack.c.b16 %v1031, %v1027
    %v1340 = vpack.c.b16 %v1032, %v1028
    %v1341 = vpack.c.b16 %v1033, %v1029
    %v1342 = vpack.c.b16 %v1034, %v1030
    %v1343 = vpack.c.b16 %v1039, %v1035
    %v1344 = vpack.c.b16 %v1040, %v1036
    %v1345 = vpack.c.b16 %v1041, %v1037
    %v1346 = vpack.c.b16 %v1042, %v1038
    %v1347 = vpack.c.b16 %v1047, %v1043
    %v1348 = vpack.c.b16 %v1048, %v1044
    %v1349 = vpack.c.b16 %v1049, %v1045
    %v1350 = vpack.c.b16 %v1050, %v1046
    %v1351 = vpack.c.b16 %v1055, %v1051
    %v1352 = vpack.c.b16 %v1056, %v1052
    %v1353 = vpack.c.b16 %v1057, %v1053
    %v1354 = vpack.c.b16 %v1058, %v1054
    %v1355 = vpack.c.b16 %v1063, %v1059
    %v1356 = vpack.c.b16 %v1064, %v1060
    %v1357 = vpack.c.b16 %v1065, %v1061
    %v1358 = vpack.c.b16 %v1066, %v1062
    %v1359 = vpack.c.b16 %v1071, %v1067
    %v1360 = vpack.c.b16 %v1072, %v1068
    %v1361 = vpack.c.b16 %v1073, %v1069
    %v1362 = vpack.c.b16 %v1074, %v1070
    %v1363 = vpack.c.b16 %v1079, %v1075
    %v1364 = vpack.c.b16 %v1080, %v1076
    %v1365 = vpack.c.b16 %v1081, %v1077
    %v1366 = vpack.c.b16 %v1082, %v1078
    %v1367 = vpack.c.b16 %v1087, %v1083
    %v1368 = vpack.c.b16 %v1088, %v1084
    %v1369 = vpack.c.b16 %v1089, %v1085
    %v1370 = vpack.c.b16 %v1090, %v1086
    %v1371 = vpack.c.b16 %v1095, %v1091
    %v1372 = vpack.c.b16 %v1096, %v1092
    %v1373 = vpack.c.b16 %v1097, %v1093
    %v1374 = vpack.c.b16 %v1098, %v1094
    %v1375 = vpack.c.b16 %v1103, %v1099
    %v1376 = vpack.c.b16 %v1104, %v1100
    %v1377 = vpack.c.b16 %v1105, %v1101
    %v1378 = vpack.c.b16 %v1106, %v1102
    %v1379 = vpack.c.b16 %v1111, %v1107
    %v1380 = vpack.c.b16 %v1112, %v1108
    %v1381 = vpack.c.b16 %v1113, %v1109
    %v1382 = vpack.c.b16 %v1114, %v1110
    %v1383 = vpack.c.b16 %v1119, %v1115
    %v1384 = vpack.c.b16 %v1120, %v1116
    %v1385 = vpack.c.b16 %v1121, %v1117
    %v1386 = vpack.c.b16 %v1122, %v1118
    %v1387 = vpack.c.b16 %v1127, %v1123
    %v1388 = vpack.c.b16 %v1128, %v1124
    %v1389 = vpack.c.b16 %v1129, %v1125
    %v1390 = vpack.c.b16 %v1130, %v1126
    %v1391 = vpack.c.b16 %v1135, %v1131
    %v1392 = vpack.c.b16 %v1136, %v1132
    %v1393 = vpack.c.b16 %v1137, %v1133
    %v1394 = vpack.c.b16 %v1138, %v1134
    %1651 = vmatprep.subr.bf16.mxu0 %v1140
    %1652 = vmatpush1.bf16.msra.mxu0 %v1139
    %1653 = vmatprep.subr.bf16.mxu0 %v1144
    %1654 = vmatpush1.bf16.msra.mxu0 %v1143
    %1655 = vmatprep.subr.bf16.mxu0 %v1148
    %1656 = vmatpush1.bf16.msra.mxu0 %v1147
    %1657 = vmatprep.subr.bf16.mxu0 %v1152
    %1658 = vmatpush1.bf16.msra.mxu0 %v1151
    %1659 = vmatprep.subr.bf16.mxu0 %v1156
    %1660 = vmatpush1.bf16.msra.mxu0 %v1155
    %1661 = vmatprep.subr.bf16.mxu0 %v1160
    %1662 = vmatpush1.bf16.msra.mxu0 %v1159
    %1663 = vmatprep.subr.bf16.mxu0 %v1164
    %1664 = vmatpush1.bf16.msra.mxu0 %v1163
    %1665 = vmatprep.subr.bf16.mxu0 %v1168
    %1666 = vmatpush1.bf16.msra.mxu0 %v1167
    %1667 = vmatprep.subr.bf16.mxu0 %v1172
    %1668 = vmatpush1.bf16.msra.mxu0 %v1171
    %1669 = vmatprep.subr.bf16.mxu0 %v1176
    %1670 = vmatpush1.bf16.msra.mxu0 %v1175
    %1671 = vmatprep.subr.bf16.mxu0 %v1180
    %1672 = vmatpush1.bf16.msra.mxu0 %v1179
    %1673 = vmatprep.subr.bf16.mxu0 %v1184
    %1674 = vmatpush1.bf16.msra.mxu0 %v1183
    %1675 = vmatprep.subr.bf16.mxu0 %v1188
    %1676 = vmatpush1.bf16.msra.mxu0 %v1187
    %1677 = vmatprep.subr.bf16.mxu0 %v1192
    %1678 = vmatpush1.bf16.msra.mxu0 %v1191
    %1679 = vmatprep.subr.bf16.mxu0 %v1196
    %1680 = vmatpush1.bf16.msra.mxu0 %v1195
    %1681 = vmatprep.subr.bf16.mxu0 %v1200
    %1682 = vmatpush1.bf16.msra.mxu0 %v1199
    %1683 = vmatprep.mubr.bf16.mxu0 %v356
    %1684 = vmatmul.mubr.bf16.gmra.mrb[0].mxu0 %v355
    %v1685 = vpop.f32.mrb[0].mxu0
    %v1686 = vadd.f32 %v326, %v1685
    %v1687 = vpop.f32.mrb[0].mxu0
    %v1688 = vadd.f32 %v330, %v1687
    %v1689 = vpop.f32.mrb[0].mxu0
    %v1690 = vpop.f32.mrb[0].mxu0
    %1691 = vdwg.mxu0
    %1692 = vmatprep.subr.bf16.mxu0 %v1204
    %1693 = vmatpush1.bf16.msra.mxu0 %v1203
    %1694 = vmatprep.subr.bf16.mxu0 %v1208
    %1695 = vmatpush1.bf16.msra.mxu0 %v1207
    %1696 = vmatprep.subr.bf16.mxu0 %v1212
    %1697 = vmatpush1.bf16.msra.mxu0 %v1211
    %1698 = vmatprep.subr.bf16.mxu0 %v1216
    %1699 = vmatpush1.bf16.msra.mxu0 %v1215
    %1700 = vmatprep.subr.bf16.mxu0 %v1220
    %1701 = vmatpush1.bf16.msra.mxu0 %v1219
    %1702 = vmatprep.subr.bf16.mxu0 %v1224
    %1703 = vmatpush1.bf16.msra.mxu0 %v1223
    %1704 = vmatprep.subr.bf16.mxu0 %v1228
    %1705 = vmatpush1.bf16.msra.mxu0 %v1227
    %1706 = vmatprep.subr.bf16.mxu0 %v1232
    %1707 = vmatpush1.bf16.msra.mxu0 %v1231
    %1708 = vmatprep.subr.bf16.mxu0 %v1236
    %1709 = vmatpush1.bf16.msra.mxu0 %v1235
    %1710 = vmatprep.subr.bf16.mxu0 %v1240
    %1711 = vmatpush1.bf16.msra.mxu0 %v1239
    %1712 = vmatprep.subr.bf16.mxu0 %v1244
    %1713 = vmatpush1.bf16.msra.mxu0 %v1243
    %1714 = vmatprep.subr.bf16.mxu0 %v1248
    %1715 = vmatpush1.bf16.msra.mxu0 %v1247
    %1716 = vmatprep.subr.bf16.mxu0 %v1252
    %1717 = vmatpush1.bf16.msra.mxu0 %v1251
    %1718 = vmatprep.subr.bf16.mxu0 %v1256
    %1719 = vmatpush1.bf16.msra.mxu0 %v1255
    %1720 = vmatprep.subr.bf16.mxu0 %v1260
    %1721 = vmatpush1.bf16.msra.mxu0 %v1259
    %1722 = vmatprep.subr.bf16.mxu0 %v1264
    %1723 = vmatpush1.bf16.msra.mxu0 %v1263
    %1724 = vmatprep.mubr.bf16.mxu0 %v358
    %1725 = vmatmul.mubr.bf16.gmra.mrb[0].mxu0 %v357
    %v1726 = vpop.f32.mrb[0].mxu0
    %v1727 = vadd.f32 %v1686, %v1726
    %v1728 = vpop.f32.mrb[0].mxu0
    %v1729 = vadd.f32 %v1688, %v1728
    %v1730 = vpop.f32.mrb[0].mxu0
    %v1731 = vpop.f32.mrb[0].mxu0
    %1732 = vdwg.mxu0
    %1733 = vmatprep.subr.bf16.mxu0 %v1268
    %1734 = vmatpush1.bf16.msra.mxu0 %v1267
    %1735 = vmatprep.subr.bf16.mxu0 %v1272
    %1736 = vmatpush1.bf16.msra.mxu0 %v1271
    %1737 = vmatprep.subr.bf16.mxu0 %v1276
    %1738 = vmatpush1.bf16.msra.mxu0 %v1275
    %1739 = vmatprep.subr.bf16.mxu0 %v1280
    %1740 = vmatpush1.bf16.msra.mxu0 %v1279
    %1741 = vmatprep.subr.bf16.mxu0 %v1284
    %1742 = vmatpush1.bf16.msra.mxu0 %v1283
    %1743 = vmatprep.subr.bf16.mxu0 %v1288
    %1744 = vmatpush1.bf16.msra.mxu0 %v1287
    %1745 = vmatprep.subr.bf16.mxu0 %v1292
    %1746 = vmatpush1.bf16.msra.mxu0 %v1291
    %1747 = vmatprep.subr.bf16.mxu0 %v1296
    %1748 = vmatpush1.bf16.msra.mxu0 %v1295
    %1749 = vmatprep.subr.bf16.mxu0 %v1300
    %1750 = vmatpush1.bf16.msra.mxu0 %v1299
    %1751 = vmatprep.subr.bf16.mxu0 %v1304
    %1752 = vmatpush1.bf16.msra.mxu0 %v1303
    %1753 = vmatprep.subr.bf16.mxu0 %v1308
    %1754 = vmatpush1.bf16.msra.mxu0 %v1307
    %1755 = vmatprep.subr.bf16.mxu0 %v1312
    %1756 = vmatpush1.bf16.msra.mxu0 %v1311
    %1757 = vmatprep.subr.bf16.mxu0 %v1316
    %1758 = vmatpush1.bf16.msra.mxu0 %v1315
    %1759 = vmatprep.subr.bf16.mxu0 %v1320
    %1760 = vmatpush1.bf16.msra.mxu0 %v1319
    %1761 = vmatprep.subr.bf16.mxu0 %v1324
    %1762 = vmatpush1.bf16.msra.mxu0 %v1323
    %1763 = vmatprep.subr.bf16.mxu0 %v1328
    %1764 = vmatpush1.bf16.msra.mxu0 %v1327
    %1765 = vmatprep.mubr.bf16.mxu0 %v360
    %1766 = vmatmul.mubr.bf16.gmra.mrb[0].mxu0 %v359
    %v1767 = vpop.f32.mrb[0].mxu0
    %v1768 = vadd.f32 %v1727, %v1767
    %v1769 = vpop.f32.mrb[0].mxu0
    %v1770 = vadd.f32 %v1729, %v1769
    %v1771 = vpop.f32.mrb[0].mxu0
    %v1772 = vpop.f32.mrb[0].mxu0
    %1773 = vdwg.mxu0
    %1774 = vmatprep.subr.bf16.mxu0 %v1332
    %1775 = vmatpush1.bf16.msra.mxu0 %v1331
    %1776 = vmatprep.subr.bf16.mxu0 %v1336
    %1777 = vmatpush1.bf16.msra.mxu0 %v1335
    %1778 = vmatprep.subr.bf16.mxu0 %v1340
    %1779 = vmatpush1.bf16.msra.mxu0 %v1339
    %1780 = vmatprep.subr.bf16.mxu0 %v1344
    %1781 = vmatpush1.bf16.msra.mxu0 %v1343
    %1782 = vmatprep.subr.bf16.mxu0 %v1348
    %1783 = vmatpush1.bf16.msra.mxu0 %v1347
    %1784 = vmatprep.subr.bf16.mxu0 %v1352
    %1785 = vmatpush1.bf16.msra.mxu0 %v1351
    %1786 = vmatprep.subr.bf16.mxu0 %v1356
    %1787 = vmatpush1.bf16.msra.mxu0 %v1355
    %1788 = vmatprep.subr.bf16.mxu0 %v1360
    %1789 = vmatpush1.bf16.msra.mxu0 %v1359
    %1790 = vmatprep.subr.bf16.mxu0 %v1364
    %1791 = vmatpush1.bf16.msra.mxu0 %v1363
    %1792 = vmatprep.subr.bf16.mxu0 %v1368
    %1793 = vmatpush1.bf16.msra.mxu0 %v1367
    %1794 = vmatprep.subr.bf16.mxu0 %v1372
    %1795 = vmatpush1.bf16.msra.mxu0 %v1371
    %1796 = vmatprep.subr.bf16.mxu0 %v1376
    %1797 = vmatpush1.bf16.msra.mxu0 %v1375
    %1798 = vmatprep.subr.bf16.mxu0 %v1380
    %1799 = vmatpush1.bf16.msra.mxu0 %v1379
    %1800 = vmatprep.subr.bf16.mxu0 %v1384
    %1801 = vmatpush1.bf16.msra.mxu0 %v1383
    %1802 = vmatprep.subr.bf16.mxu0 %v1388
    %1803 = vmatpush1.bf16.msra.mxu0 %v1387
    %1804 = vmatprep.subr.bf16.mxu0 %v1392
    %1805 = vmatpush1.bf16.msra.mxu0 %v1391
    %1806 = vmatprep.mubr.bf16.mxu0 %v362
    %1807 = vmatmul.mubr.bf16.gmra.mrb[0].mxu0 %v361
    %v1808 = vpop.f32.mrb[0].mxu0
    %v1809 = vadd.f32 %v1768, %v1808
    %v1810 = vpop.f32.mrb[0].mxu0
    %v1811 = vadd.f32 %v1770, %v1810
    %v1812 = vpop.f32.mrb[0].mxu0
    %v1813 = vpop.f32.mrb[0].mxu0
    %1814 = vdwg.mxu0
    %1815 = vmatprep.subr.bf16.mxu0 %v1142
    %1816 = vmatpush1.bf16.msra.mxu0 %v1141
    %1817 = vmatprep.subr.bf16.mxu0 %v1146
    %1818 = vmatpush1.bf16.msra.mxu0 %v1145
    %1819 = vmatprep.subr.bf16.mxu0 %v1150
    %1820 = vmatpush1.bf16.msra.mxu0 %v1149
    %1821 = vmatprep.subr.bf16.mxu0 %v1154
    %1822 = vmatpush1.bf16.msra.mxu0 %v1153
    %1823 = vmatprep.subr.bf16.mxu0 %v1158
    %1824 = vmatpush1.bf16.msra.mxu0 %v1157
    %1825 = vmatprep.subr.bf16.mxu0 %v1162
    %1826 = vmatpush1.bf16.msra.mxu0 %v1161
    %1827 = vmatprep.subr.bf16.mxu0 %v1166
    %1828 = vmatpush1.bf16.msra.mxu0 %v1165
    %1829 = vmatprep.subr.bf16.mxu0 %v1170
    %1830 = vmatpush1.bf16.msra.mxu0 %v1169
    %1831 = vmatprep.subr.bf16.mxu0 %v1174
    %1832 = vmatpush1.bf16.msra.mxu0 %v1173
    %1833 = vmatprep.subr.bf16.mxu0 %v1178
    %1834 = vmatpush1.bf16.msra.mxu0 %v1177
    %1835 = vmatprep.subr.bf16.mxu0 %v1182
    %1836 = vmatpush1.bf16.msra.mxu0 %v1181
    %1837 = vmatprep.subr.bf16.mxu0 %v1186
    %1838 = vmatpush1.bf16.msra.mxu0 %v1185
    %1839 = vmatprep.subr.bf16.mxu0 %v1190
    %1840 = vmatpush1.bf16.msra.mxu0 %v1189
    %1841 = vmatprep.subr.bf16.mxu0 %v1194
    %1842 = vmatpush1.bf16.msra.mxu0 %v1193
    %1843 = vmatprep.subr.bf16.mxu0 %v1198
    %1844 = vmatpush1.bf16.msra.mxu0 %v1197
    %1845 = vmatprep.subr.bf16.mxu0 %v1202
    %1846 = vmatpush1.bf16.msra.mxu0 %v1201
    %1847 = vmatprep.mubr.bf16.mxu0 %v356
    %1848 = vmatmul.mubr.bf16.gmra.mrb[0].mxu0 %v355
    %v1849 = vpop.f32.mrb[0].mxu0
    %v1850 = vadd.f32 %v334, %v1849
    %v1851 = vpop.f32.mrb[0].mxu0
    %v1852 = vadd.f32 %v338, %v1851
    %v1853 = vpop.f32.mrb[0].mxu0
    %v1854 = vpop.f32.mrb[0].mxu0
    %1855 = vdwg.mxu0
    %1856 = vmatprep.subr.bf16.mxu0 %v1206
    %1857 = vmatpush1.bf16.msra.mxu0 %v1205
    %1858 = vmatprep.subr.bf16.mxu0 %v1210
    %1859 = vmatpush1.bf16.msra.mxu0 %v1209
    %1860 = vmatprep.subr.bf16.mxu0 %v1214
    %1861 = vmatpush1.bf16.msra.mxu0 %v1213
    %1862 = vmatprep.subr.bf16.mxu0 %v1218
    %1863 = vmatpush1.bf16.msra.mxu0 %v1217
    %1864 = vmatprep.subr.bf16.mxu0 %v1222
    %1865 = vmatpush1.bf16.msra.mxu0 %v1221
    %1866 = vmatprep.subr.bf16.mxu0 %v1226
    %1867 = vmatpush1.bf16.msra.mxu0 %v1225
    %1868 = vmatprep.subr.bf16.mxu0 %v1230
    %1869 = vmatpush1.bf16.msra.mxu0 %v1229
    %1870 = vmatprep.subr.bf16.mxu0 %v1234
    %1871 = vmatpush1.bf16.msra.mxu0 %v1233
    %1872 = vmatprep.subr.bf16.mxu0 %v1238
    %1873 = vmatpush1.bf16.msra.mxu0 %v1237
    %1874 = vmatprep.subr.bf16.mxu0 %v1242
    %1875 = vmatpush1.bf16.msra.mxu0 %v1241
    %1876 = vmatprep.subr.bf16.mxu0 %v1246
    %1877 = vmatpush1.bf16.msra.mxu0 %v1245
    %1878 = vmatprep.subr.bf16.mxu0 %v1250
    %1879 = vmatpush1.bf16.msra.mxu0 %v1249
    %1880 = vmatprep.subr.bf16.mxu0 %v1254
    %1881 = vmatpush1.bf16.msra.mxu0 %v1253
    %1882 = vmatprep.subr.bf16.mxu0 %v1258
    %1883 = vmatpush1.bf16.msra.mxu0 %v1257
    %1884 = vmatprep.subr.bf16.mxu0 %v1262
    %1885 = vmatpush1.bf16.msra.mxu0 %v1261
    %1886 = vmatprep.subr.bf16.mxu0 %v1266
    %1887 = vmatpush1.bf16.msra.mxu0 %v1265
    %1888 = vmatprep.mubr.bf16.mxu0 %v358
    %1889 = vmatmul.mubr.bf16.gmra.mrb[0].mxu0 %v357
    %v1890 = vpop.f32.mrb[0].mxu0
    %v1891 = vadd.f32 %v1850, %v1890
    %v1892 = vpop.f32.mrb[0].mxu0
    %v1893 = vadd.f32 %v1852, %v1892
    %v1894 = vpop.f32.mrb[0].mxu0
    %v1895 = vpop.f32.mrb[0].mxu0
    %1896 = vdwg.mxu0
    %1897 = vmatprep.subr.bf16.mxu0 %v1270
    %1898 = vmatpush1.bf16.msra.mxu0 %v1269
    %1899 = vmatprep.subr.bf16.mxu0 %v1274
    %1900 = vmatpush1.bf16.msra.mxu0 %v1273
    %1901 = vmatprep.subr.bf16.mxu0 %v1278
    %1902 = vmatpush1.bf16.msra.mxu0 %v1277
    %1903 = vmatprep.subr.bf16.mxu0 %v1282
    %1904 = vmatpush1.bf16.msra.mxu0 %v1281
    %1905 = vmatprep.subr.bf16.mxu0 %v1286
    %1906 = vmatpush1.bf16.msra.mxu0 %v1285
    %1907 = vmatprep.subr.bf16.mxu0 %v1290
    %1908 = vmatpush1.bf16.msra.mxu0 %v1289
    %1909 = vmatprep.subr.bf16.mxu0 %v1294
    %1910 = vmatpush1.bf16.msra.mxu0 %v1293
    %1911 = vmatprep.subr.bf16.mxu0 %v1298
    %1912 = vmatpush1.bf16.msra.mxu0 %v1297
    %1913 = vmatprep.subr.bf16.mxu0 %v1302
    %1914 = vmatpush1.bf16.msra.mxu0 %v1301
    %1915 = vmatprep.subr.bf16.mxu0 %v1306
    %1916 = vmatpush1.bf16.msra.mxu0 %v1305
    %1917 = vmatprep.subr.bf16.mxu0 %v1310
    %1918 = vmatpush1.bf16.msra.mxu0 %v1309
    %1919 = vmatprep.subr.bf16.mxu0 %v1314
    %1920 = vmatpush1.bf16.msra.mxu0 %v1313
    %1921 = vmatprep.subr.bf16.mxu0 %v1318
    %1922 = vmatpush1.bf16.msra.mxu0 %v1317
    %1923 = vmatprep.subr.bf16.mxu0 %v1322
    %1924 = vmatpush1.bf16.msra.mxu0 %v1321
    %1925 = vmatprep.subr.bf16.mxu0 %v1326
    %1926 = vmatpush1.bf16.msra.mxu0 %v1325
    %1927 = vmatprep.subr.bf16.mxu0 %v1330
    %1928 = vmatpush1.bf16.msra.mxu0 %v1329
    %1929 = vmatprep.mubr.bf16.mxu0 %v360
    %1930 = vmatmul.mubr.bf16.gmra.mrb[0].mxu0 %v359
    %v1931 = vpop.f32.mrb[0].mxu0
    %v1932 = vadd.f32 %v1891, %v1931
    %v1933 = vpop.f32.mrb[0].mxu0
    %v1934 = vadd.f32 %v1893, %v1933
    %v1935 = vpop.f32.mrb[0].mxu0
    %v1936 = vpop.f32.mrb[0].mxu0
    %1937 = vdwg.mxu0
    %1938 = vmatprep.subr.bf16.mxu0 %v1334
    %1939 = vmatpush1.bf16.msra.mxu0 %v1333
    %1940 = vmatprep.subr.bf16.mxu0 %v1338
    %1941 = vmatpush1.bf16.msra.mxu0 %v1337
    %1942 = vmatprep.subr.bf16.mxu0 %v1342
    %1943 = vmatpush1.bf16.msra.mxu0 %v1341
    %1944 = vmatprep.subr.bf16.mxu0 %v1346
    %1945 = vmatpush1.bf16.msra.mxu0 %v1345
    %1946 = vmatprep.subr.bf16.mxu0 %v1350
    %1947 = vmatpush1.bf16.msra.mxu0 %v1349
    %1948 = vmatprep.subr.bf16.mxu0 %v1354
    %1949 = vmatpush1.bf16.msra.mxu0 %v1353
    %1950 = vmatprep.subr.bf16.mxu0 %v1358
    %1951 = vmatpush1.bf16.msra.mxu0 %v1357
    %1952 = vmatprep.subr.bf16.mxu0 %v1362
    %1953 = vmatpush1.bf16.msra.mxu0 %v1361
    %1954 = vmatprep.subr.bf16.mxu0 %v1366
    %1955 = vmatpush1.bf16.msra.mxu0 %v1365
    %1956 = vmatprep.subr.bf16.mxu0 %v1370
    %1957 = vmatpush1.bf16.msra.mxu0 %v1369
    %1958 = vmatprep.subr.bf16.mxu0 %v1374
    %1959 = vmatpush1.bf16.msra.mxu0 %v1373
    %1960 = vmatprep.subr.bf16.mxu0 %v1378
    %1961 = vmatpush1.bf16.msra.mxu0 %v1377
    %1962 = vmatprep.subr.bf16.mxu0 %v1382
    %1963 = vmatpush1.bf16.msra.mxu0 %v1381
    %1964 = vmatprep.subr.bf16.mxu0 %v1386
    %1965 = vmatpush1.bf16.msra.mxu0 %v1385
    %1966 = vmatprep.subr.bf16.mxu0 %v1390
    %1967 = vmatpush1.bf16.msra.mxu0 %v1389
    %1968 = vmatprep.subr.bf16.mxu0 %v1394
    %1969 = vmatpush1.bf16.msra.mxu0 %v1393
    %1970 = vmatprep.mubr.bf16.mxu0 %v362
    %1971 = vmatmul.mubr.bf16.gmra.mrb[0].mxu0 %v361
    %v1972 = vpop.f32.mrb[0].mxu0
    %v1973 = vadd.f32 %v1932, %v1972
    %v1974 = vpop.f32.mrb[0].mxu0
    %v1975 = vadd.f32 %v1934, %v1974
    %v1976 = vpop.f32.mrb[0].mxu0
    %v1977 = vpop.f32.mrb[0].mxu0
    %1978 = vdwg.mxu0
    %v1979 = vmax.f32 %v1809, 0.0
    %v1980 = vmax.f32 %v1811, 0.0
    %v1981 = vmax.f32 %v1973, 0.0
    %v1982 = vmax.f32 %v1975, 0.0
    %v1983 = vpack.c.bf16 %v1979, %v1979
    %v1984 = vpack.c.bf16 %v1980, %v1980
    %v1985 = vpack.c.bf16 %v1981, %v1981
    %v1986 = vpack.c.bf16 %v1982, %v1982
    %v1987 = vld [vmem:[#allocation4] sm:$0xff]
    %v1988 = vld [vmem:[#allocation4 + $0x8] sm:$0xff]
    %v1989 = vld [vmem:[#allocation4 + $0x10] sm:$0xff]
    %v1990 = vld [vmem:[#allocation4 + $0x18] sm:$0xff]
    %v1991 = vld [vmem:[#allocation4 + $0x20] sm:$0xff]
    %v1992 = vld [vmem:[#allocation4 + $0x28] sm:$0xff]
    %v1993 = vld [vmem:[#allocation4 + $0x30] sm:$0xff]
    %v1994 = vld [vmem:[#allocation4 + $0x38] sm:$0xff]
    %v1995 = vld [vmem:[#allocation4 + $0x40] sm:$0xff]
    %v1996 = vld [vmem:[#allocation4 + $0x48] sm:$0xff]
    %v1997 = vld [vmem:[#allocation4 + $0x50] sm:$0xff]
    %v1998 = vld [vmem:[#allocation4 + $0x58] sm:$0xff]
    %v1999 = vld [vmem:[#allocation4 + $0x60] sm:$0xff]
    %v2000 = vld [vmem:[#allocation4 + $0x68] sm:$0xff]
    %v2001 = vld [vmem:[#allocation4 + $0x70] sm:$0xff]
    %v2002 = vld [vmem:[#allocation4 + $0x78] sm:$0xff]
    %v2003 = vld [vmem:[#allocation4 + $0x80] sm:$0xff]
    %v2004 = vld [vmem:[#allocation4 + $0x88] sm:$0xff]
    %v2005 = vld [vmem:[#allocation4 + $0x90] sm:$0xff]
    %v2006 = vld [vmem:[#allocation4 + $0x98] sm:$0xff]
    %v2007 = vld [vmem:[#allocation4 + $0xa0] sm:$0xff]
    %v2008 = vld [vmem:[#allocation4 + $0xa8] sm:$0xff]
    %v2009 = vld [vmem:[#allocation4 + $0xb0] sm:$0xff]
    %v2010 = vld [vmem:[#allocation4 + $0xb8] sm:$0xff]
    %v2011 = vld [vmem:[#allocation4 + $0xc0] sm:$0xff]
    %v2012 = vld [vmem:[#allocation4 + $0xc8] sm:$0xff]
    %v2013 = vld [vmem:[#allocation4 + $0xd0] sm:$0xff]
    %v2014 = vld [vmem:[#allocation4 + $0xd8] sm:$0xff]
    %v2015 = vld [vmem:[#allocation4 + $0xe0] sm:$0xff]
    %v2016 = vld [vmem:[#allocation4 + $0xe8] sm:$0xff]
    %v2017 = vld [vmem:[#allocation4 + $0xf0] sm:$0xff]
    %v2018 = vld [vmem:[#allocation4 + $0xf8] sm:$0xff]
    %v2019 = vld [vmem:[#allocation4 + $0x100] sm:$0xff]
    %v2020 = vld [vmem:[#allocation4 + $0x108] sm:$0xff]
    %v2021 = vld [vmem:[#allocation4 + $0x110] sm:$0xff]
    %v2022 = vld [vmem:[#allocation4 + $0x118] sm:$0xff]
    %v2023 = vld [vmem:[#allocation4 + $0x120] sm:$0xff]
    %v2024 = vld [vmem:[#allocation4 + $0x128] sm:$0xff]
    %v2025 = vld [vmem:[#allocation4 + $0x130] sm:$0xff]
    %v2026 = vld [vmem:[#allocation4 + $0x138] sm:$0xff]
    %v2027 = vld [vmem:[#allocation4 + $0x140] sm:$0xff]
    %v2028 = vld [vmem:[#allocation4 + $0x148] sm:$0xff]
    %v2029 = vld [vmem:[#allocation4 + $0x150] sm:$0xff]
    %v2030 = vld [vmem:[#allocation4 + $0x158] sm:$0xff]
    %v2031 = vld [vmem:[#allocation4 + $0x160] sm:$0xff]
    %v2032 = vld [vmem:[#allocation4 + $0x168] sm:$0xff]
    %v2033 = vld [vmem:[#allocation4 + $0x170] sm:$0xff]
    %v2034 = vld [vmem:[#allocation4 + $0x178] sm:$0xff]
    %v2035 = vld [vmem:[#allocation4 + $0x180] sm:$0xff]
    %v2036 = vld [vmem:[#allocation4 + $0x188] sm:$0xff]
    %v2037 = vld [vmem:[#allocation4 + $0x190] sm:$0xff]
    %v2038 = vld [vmem:[#allocation4 + $0x198] sm:$0xff]
    %v2039 = vld [vmem:[#allocation4 + $0x1a0] sm:$0xff]
    %v2040 = vld [vmem:[#allocation4 + $0x1a8] sm:$0xff]
    %v2041 = vld [vmem:[#allocation4 + $0x1b0] sm:$0xff]
    %v2042 = vld [vmem:[#allocation4 + $0x1b8] sm:$0xff]
    %v2043 = vld [vmem:[#allocation4 + $0x1c0] sm:$0xff]
    %v2044 = vld [vmem:[#allocation4 + $0x1c8] sm:$0xff]
    %v2045 = vld [vmem:[#allocation4 + $0x1d0] sm:$0xff]
    %v2046 = vld [vmem:[#allocation4 + $0x1d8] sm:$0xff]
    %v2047 = vld [vmem:[#allocation4 + $0x1e0] sm:$0xff]
    %v2048 = vld [vmem:[#allocation4 + $0x1e8] sm:$0xff]
    %v2049 = vld [vmem:[#allocation4 + $0x1f0] sm:$0xff]
    %v2050 = vld [vmem:[#allocation4 + $0x1f8] sm:$0xff]
    %v2051 = vld [vmem:[#allocation4 + $0x200] sm:$0xff]
    %v2052 = vld [vmem:[#allocation4 + $0x208] sm:$0xff]
    %v2053 = vld [vmem:[#allocation4 + $0x210] sm:$0xff]
    %v2054 = vld [vmem:[#allocation4 + $0x218] sm:$0xff]
    %v2055 = vld [vmem:[#allocation4 + $0x220] sm:$0xff]
    %v2056 = vld [vmem:[#allocation4 + $0x228] sm:$0xff]
    %v2057 = vld [vmem:[#allocation4 + $0x230] sm:$0xff]
    %v2058 = vld [vmem:[#allocation4 + $0x238] sm:$0xff]
    %v2059 = vld [vmem:[#allocation4 + $0x240] sm:$0xff]
    %v2060 = vld [vmem:[#allocation4 + $0x248] sm:$0xff]
    %v2061 = vld [vmem:[#allocation4 + $0x250] sm:$0xff]
    %v2062 = vld [vmem:[#allocation4 + $0x258] sm:$0xff]
    %v2063 = vld [vmem:[#allocation4 + $0x260] sm:$0xff]
    %v2064 = vld [vmem:[#allocation4 + $0x268] sm:$0xff]
    %v2065 = vld [vmem:[#allocation4 + $0x270] sm:$0xff]
    %v2066 = vld [vmem:[#allocation4 + $0x278] sm:$0xff]
    %v2067 = vld [vmem:[#allocation4 + $0x280] sm:$0xff]
    %v2068 = vld [vmem:[#allocation4 + $0x288] sm:$0xff]
    %v2069 = vld [vmem:[#allocation4 + $0x290] sm:$0xff]
    %v2070 = vld [vmem:[#allocation4 + $0x298] sm:$0xff]
    %v2071 = vld [vmem:[#allocation4 + $0x2a0] sm:$0xff]
    %v2072 = vld [vmem:[#allocation4 + $0x2a8] sm:$0xff]
    %v2073 = vld [vmem:[#allocation4 + $0x2b0] sm:$0xff]
    %v2074 = vld [vmem:[#allocation4 + $0x2b8] sm:$0xff]
    %v2075 = vld [vmem:[#allocation4 + $0x2c0] sm:$0xff]
    %v2076 = vld [vmem:[#allocation4 + $0x2c8] sm:$0xff]
    %v2077 = vld [vmem:[#allocation4 + $0x2d0] sm:$0xff]
    %v2078 = vld [vmem:[#allocation4 + $0x2d8] sm:$0xff]
    %v2079 = vld [vmem:[#allocation4 + $0x2e0] sm:$0xff]
    %v2080 = vld [vmem:[#allocation4 + $0x2e8] sm:$0xff]
    %v2081 = vld [vmem:[#allocation4 + $0x2f0] sm:$0xff]
    %v2082 = vld [vmem:[#allocation4 + $0x2f8] sm:$0xff]
    %v2083 = vld [vmem:[#allocation4 + $0x300] sm:$0xff]
    %v2084 = vld [vmem:[#allocation4 + $0x308] sm:$0xff]
    %v2085 = vld [vmem:[#allocation4 + $0x310] sm:$0xff]
    %v2086 = vld [vmem:[#allocation4 + $0x318] sm:$0xff]
    %v2087 = vld [vmem:[#allocation4 + $0x320] sm:$0xff]
    %v2088 = vld [vmem:[#allocation4 + $0x328] sm:$0xff]
    %v2089 = vld [vmem:[#allocation4 + $0x330] sm:$0xff]
    %v2090 = vld [vmem:[#allocation4 + $0x338] sm:$0xff]
    %v2091 = vld [vmem:[#allocation4 + $0x340] sm:$0xff]
    %v2092 = vld [vmem:[#allocation4 + $0x348] sm:$0xff]
    %v2093 = vld [vmem:[#allocation4 + $0x350] sm:$0xff]
    %v2094 = vld [vmem:[#allocation4 + $0x358] sm:$0xff]
    %v2095 = vld [vmem:[#allocation4 + $0x360] sm:$0xff]
    %v2096 = vld [vmem:[#allocation4 + $0x368] sm:$0xff]
    %v2097 = vld [vmem:[#allocation4 + $0x370] sm:$0xff]
    %v2098 = vld [vmem:[#allocation4 + $0x378] sm:$0xff]
    %v2099 = vld [vmem:[#allocation4 + $0x380] sm:$0xff]
    %v2100 = vld [vmem:[#allocation4 + $0x388] sm:$0xff]
    %v2101 = vld [vmem:[#allocation4 + $0x390] sm:$0xff]
    %v2102 = vld [vmem:[#allocation4 + $0x398] sm:$0xff]
    %v2103 = vld [vmem:[#allocation4 + $0x3a0] sm:$0xff]
    %v2104 = vld [vmem:[#allocation4 + $0x3a8] sm:$0xff]
    %v2105 = vld [vmem:[#allocation4 + $0x3b0] sm:$0xff]
    %v2106 = vld [vmem:[#allocation4 + $0x3b8] sm:$0xff]
    %v2107 = vld [vmem:[#allocation4 + $0x3c0] sm:$0xff]
    %v2108 = vld [vmem:[#allocation4 + $0x3c8] sm:$0xff]
    %v2109 = vld [vmem:[#allocation4 + $0x3d0] sm:$0xff]
    %v2110 = vld [vmem:[#allocation4 + $0x3d8] sm:$0xff]
    %v2111 = vld [vmem:[#allocation4 + $0x3e0] sm:$0xff]
    %v2112 = vld [vmem:[#allocation4 + $0x3e8] sm:$0xff]
    %v2113 = vld [vmem:[#allocation4 + $0x3f0] sm:$0xff]
    %v2114 = vld [vmem:[#allocation4 + $0x3f8] sm:$0xff]
    %v2115 = vld [vmem:[%s4] sm:$0xf]
    %v2117 = vlaneseq
    %v2118 = vshrl.u32 %v2117, 7
    %v2119 = vsub.s32 0, %v2118
    %v2120 = vrot.slane %v2115, %v2119
    %v2121 = vlaneseq
    %v2122 = vshrl.u32 %v2121, 7
    %v2123 = vsub.s32 1, %v2122
    %v2124 = vrot.slane %v2115, %v2123
    %v2125 = vlaneseq
    %v2126 = vshrl.u32 %v2125, 7
    %v2127 = vsub.s32 2, %v2126
    %v2128 = vrot.slane %v2115, %v2127
    %v2129 = vlaneseq
    %v2130 = vshrl.u32 %v2129, 7
    %v2131 = vsub.s32 3, %v2130
    %v2132 = vrot.slane %v2115, %v2131
    %v2265 = vunpack.c.l.b16 %v1987
    %v2266 = vunpack.c.h.b16 %v1987
    %v2267 = vunpack.c.l.b16 %v1988
    %v2268 = vunpack.c.h.b16 %v1988
    %v2269 = vunpack.c.l.b16 %v1989
    %v2270 = vunpack.c.h.b16 %v1989
    %v2271 = vunpack.c.l.b16 %v1990
    %v2272 = vunpack.c.h.b16 %v1990
    %v2273 = vunpack.c.l.b16 %v1991
    %v2274 = vunpack.c.h.b16 %v1991
    %v2275 = vunpack.c.l.b16 %v1992
    %v2276 = vunpack.c.h.b16 %v1992
    %v2277 = vunpack.c.l.b16 %v1993
    %v2278 = vunpack.c.h.b16 %v1993
    %v2279 = vunpack.c.l.b16 %v1994
    %v2280 = vunpack.c.h.b16 %v1994
    %v2281 = vunpack.c.l.b16 %v1995
    %v2282 = vunpack.c.h.b16 %v1995
    %v2283 = vunpack.c.l.b16 %v1996
    %v2284 = vunpack.c.h.b16 %v1996
    %v2285 = vunpack.c.l.b16 %v1997
    %v2286 = vunpack.c.h.b16 %v1997
    %v2287 = vunpack.c.l.b16 %v1998
    %v2288 = vunpack.c.h.b16 %v1998
    %v2289 = vunpack.c.l.b16 %v1999
    %v2290 = vunpack.c.h.b16 %v1999
    %v2291 = vunpack.c.l.b16 %v2000
    %v2292 = vunpack.c.h.b16 %v2000
    %v2293 = vunpack.c.l.b16 %v2001
    %v2294 = vunpack.c.h.b16 %v2001
    %v2295 = vunpack.c.l.b16 %v2002
    %v2296 = vunpack.c.h.b16 %v2002
    %v2297 = vunpack.c.l.b16 %v2003
    %v2298 = vunpack.c.h.b16 %v2003
    %v2299 = vunpack.c.l.b16 %v2004
    %v2300 = vunpack.c.h.b16 %v2004
    %v2301 = vunpack.c.l.b16 %v2005
    %v2302 = vunpack.c.h.b16 %v2005
    %v2303 = vunpack.c.l.b16 %v2006
    %v2304 = vunpack.c.h.b16 %v2006
    %v2305 = vunpack.c.l.b16 %v2007
    %v2306 = vunpack.c.h.b16 %v2007
    %v2307 = vunpack.c.l.b16 %v2008
    %v2308 = vunpack.c.h.b16 %v2008
    %v2309 = vunpack.c.l.b16 %v2009
    %v2310 = vunpack.c.h.b16 %v2009
    %v2311 = vunpack.c.l.b16 %v2010
    %v2312 = vunpack.c.h.b16 %v2010
    %v2313 = vunpack.c.l.b16 %v2011
    %v2314 = vunpack.c.h.b16 %v2011
    %v2315 = vunpack.c.l.b16 %v2012
    %v2316 = vunpack.c.h.b16 %v2012
    %v2317 = vunpack.c.l.b16 %v2013
    %v2318 = vunpack.c.h.b16 %v2013
    %v2319 = vunpack.c.l.b16 %v2014
    %v2320 = vunpack.c.h.b16 %v2014
    %v2321 = vunpack.c.l.b16 %v2015
    %v2322 = vunpack.c.h.b16 %v2015
    %v2323 = vunpack.c.l.b16 %v2016
    %v2324 = vunpack.c.h.b16 %v2016
    %v2325 = vunpack.c.l.b16 %v2017
    %v2326 = vunpack.c.h.b16 %v2017
    %v2327 = vunpack.c.l.b16 %v2018
    %v2328 = vunpack.c.h.b16 %v2018
    %v2329 = vunpack.c.l.b16 %v2019
    %v2330 = vunpack.c.h.b16 %v2019
    %v2331 = vunpack.c.l.b16 %v2020
    %v2332 = vunpack.c.h.b16 %v2020
    %v2333 = vunpack.c.l.b16 %v2021
    %v2334 = vunpack.c.h.b16 %v2021
    %v2335 = vunpack.c.l.b16 %v2022
    %v2336 = vunpack.c.h.b16 %v2022
    %v2337 = vunpack.c.l.b16 %v2023
    %v2338 = vunpack.c.h.b16 %v2023
    %v2339 = vunpack.c.l.b16 %v2024
    %v2340 = vunpack.c.h.b16 %v2024
    %v2341 = vunpack.c.l.b16 %v2025
    %v2342 = vunpack.c.h.b16 %v2025
    %v2343 = vunpack.c.l.b16 %v2026
    %v2344 = vunpack.c.h.b16 %v2026
    %v2345 = vunpack.c.l.b16 %v2027
    %v2346 = vunpack.c.h.b16 %v2027
    %v2347 = vunpack.c.l.b16 %v2028
    %v2348 = vunpack.c.h.b16 %v2028
    %v2349 = vunpack.c.l.b16 %v2029
    %v2350 = vunpack.c.h.b16 %v2029
    %v2351 = vunpack.c.l.b16 %v2030
    %v2352 = vunpack.c.h.b16 %v2030
    %v2353 = vunpack.c.l.b16 %v2031
    %v2354 = vunpack.c.h.b16 %v2031
    %v2355 = vunpack.c.l.b16 %v2032
    %v2356 = vunpack.c.h.b16 %v2032
    %v2357 = vunpack.c.l.b16 %v2033
    %v2358 = vunpack.c.h.b16 %v2033
    %v2359 = vunpack.c.l.b16 %v2034
    %v2360 = vunpack.c.h.b16 %v2034
    %v2361 = vunpack.c.l.b16 %v2035
    %v2362 = vunpack.c.h.b16 %v2035
    %v2363 = vunpack.c.l.b16 %v2036
    %v2364 = vunpack.c.h.b16 %v2036
    %v2365 = vunpack.c.l.b16 %v2037
    %v2366 = vunpack.c.h.b16 %v2037
    %v2367 = vunpack.c.l.b16 %v2038
    %v2368 = vunpack.c.h.b16 %v2038
    %v2369 = vunpack.c.l.b16 %v2039
    %v2370 = vunpack.c.h.b16 %v2039
    %v2371 = vunpack.c.l.b16 %v2040
    %v2372 = vunpack.c.h.b16 %v2040
    %v2373 = vunpack.c.l.b16 %v2041
    %v2374 = vunpack.c.h.b16 %v2041
    %v2375 = vunpack.c.l.b16 %v2042
    %v2376 = vunpack.c.h.b16 %v2042
    %v2377 = vunpack.c.l.b16 %v2043
    %v2378 = vunpack.c.h.b16 %v2043
    %v2379 = vunpack.c.l.b16 %v2044
    %v2380 = vunpack.c.h.b16 %v2044
    %v2381 = vunpack.c.l.b16 %v2045
    %v2382 = vunpack.c.h.b16 %v2045
    %v2383 = vunpack.c.l.b16 %v2046
    %v2384 = vunpack.c.h.b16 %v2046
    %v2385 = vunpack.c.l.b16 %v2047
    %v2386 = vunpack.c.h.b16 %v2047
    %v2387 = vunpack.c.l.b16 %v2048
    %v2388 = vunpack.c.h.b16 %v2048
    %v2389 = vunpack.c.l.b16 %v2049
    %v2390 = vunpack.c.h.b16 %v2049
    %v2391 = vunpack.c.l.b16 %v2050
    %v2392 = vunpack.c.h.b16 %v2050
    %v2393 = vunpack.c.l.b16 %v2051
    %v2394 = vunpack.c.h.b16 %v2051
    %v2395 = vunpack.c.l.b16 %v2052
    %v2396 = vunpack.c.h.b16 %v2052
    %v2397 = vunpack.c.l.b16 %v2053
    %v2398 = vunpack.c.h.b16 %v2053
    %v2399 = vunpack.c.l.b16 %v2054
    %v2400 = vunpack.c.h.b16 %v2054
    %v2401 = vunpack.c.l.b16 %v2055
    %v2402 = vunpack.c.h.b16 %v2055
    %v2403 = vunpack.c.l.b16 %v2056
    %v2404 = vunpack.c.h.b16 %v2056
    %v2405 = vunpack.c.l.b16 %v2057
    %v2406 = vunpack.c.h.b16 %v2057
    %v2407 = vunpack.c.l.b16 %v2058
    %v2408 = vunpack.c.h.b16 %v2058
    %v2409 = vunpack.c.l.b16 %v2059
    %v2410 = vunpack.c.h.b16 %v2059
    %v2411 = vunpack.c.l.b16 %v2060
    %v2412 = vunpack.c.h.b16 %v2060
    %v2413 = vunpack.c.l.b16 %v2061
    %v2414 = vunpack.c.h.b16 %v2061
    %v2415 = vunpack.c.l.b16 %v2062
    %v2416 = vunpack.c.h.b16 %v2062
    %v2417 = vunpack.c.l.b16 %v2063
    %v2418 = vunpack.c.h.b16 %v2063
    %v2419 = vunpack.c.l.b16 %v2064
    %v2420 = vunpack.c.h.b16 %v2064
    %v2421 = vunpack.c.l.b16 %v2065
    %v2422 = vunpack.c.h.b16 %v2065
    %v2423 = vunpack.c.l.b16 %v2066
    %v2424 = vunpack.c.h.b16 %v2066
    %v2425 = vunpack.c.l.b16 %v2067
    %v2426 = vunpack.c.h.b16 %v2067
    %v2427 = vunpack.c.l.b16 %v2068
    %v2428 = vunpack.c.h.b16 %v2068
    %v2429 = vunpack.c.l.b16 %v2069
    %v2430 = vunpack.c.h.b16 %v2069
    %v2431 = vunpack.c.l.b16 %v2070
    %v2432 = vunpack.c.h.b16 %v2070
    %v2433 = vunpack.c.l.b16 %v2071
    %v2434 = vunpack.c.h.b16 %v2071
    %v2435 = vunpack.c.l.b16 %v2072
    %v2436 = vunpack.c.h.b16 %v2072
    %v2437 = vunpack.c.l.b16 %v2073
    %v2438 = vunpack.c.h.b16 %v2073
    %v2439 = vunpack.c.l.b16 %v2074
    %v2440 = vunpack.c.h.b16 %v2074
    %v2441 = vunpack.c.l.b16 %v2075
    %v2442 = vunpack.c.h.b16 %v2075
    %v2443 = vunpack.c.l.b16 %v2076
    %v2444 = vunpack.c.h.b16 %v2076
    %v2445 = vunpack.c.l.b16 %v2077
    %v2446 = vunpack.c.h.b16 %v2077
    %v2447 = vunpack.c.l.b16 %v2078
    %v2448 = vunpack.c.h.b16 %v2078
    %v2449 = vunpack.c.l.b16 %v2079
    %v2450 = vunpack.c.h.b16 %v2079
    %v2451 = vunpack.c.l.b16 %v2080
    %v2452 = vunpack.c.h.b16 %v2080
    %v2453 = vunpack.c.l.b16 %v2081
    %v2454 = vunpack.c.h.b16 %v2081
    %v2455 = vunpack.c.l.b16 %v2082
    %v2456 = vunpack.c.h.b16 %v2082
    %v2457 = vunpack.c.l.b16 %v2083
    %v2458 = vunpack.c.h.b16 %v2083
    %v2459 = vunpack.c.l.b16 %v2084
    %v2460 = vunpack.c.h.b16 %v2084
    %v2461 = vunpack.c.l.b16 %v2085
    %v2462 = vunpack.c.h.b16 %v2085
    %v2463 = vunpack.c.l.b16 %v2086
    %v2464 = vunpack.c.h.b16 %v2086
    %v2465 = vunpack.c.l.b16 %v2087
    %v2466 = vunpack.c.h.b16 %v2087
    %v2467 = vunpack.c.l.b16 %v2088
    %v2468 = vunpack.c.h.b16 %v2088
    %v2469 = vunpack.c.l.b16 %v2089
    %v2470 = vunpack.c.h.b16 %v2089
    %v2471 = vunpack.c.l.b16 %v2090
    %v2472 = vunpack.c.h.b16 %v2090
    %v2473 = vunpack.c.l.b16 %v2091
    %v2474 = vunpack.c.h.b16 %v2091
    %v2475 = vunpack.c.l.b16 %v2092
    %v2476 = vunpack.c.h.b16 %v2092
    %v2477 = vunpack.c.l.b16 %v2093
    %v2478 = vunpack.c.h.b16 %v2093
    %v2479 = vunpack.c.l.b16 %v2094
    %v2480 = vunpack.c.h.b16 %v2094
    %v2481 = vunpack.c.l.b16 %v2095
    %v2482 = vunpack.c.h.b16 %v2095
    %v2483 = vunpack.c.l.b16 %v2096
    %v2484 = vunpack.c.h.b16 %v2096
    %v2485 = vunpack.c.l.b16 %v2097
    %v2486 = vunpack.c.h.b16 %v2097
    %v2487 = vunpack.c.l.b16 %v2098
    %v2488 = vunpack.c.h.b16 %v2098
    %v2489 = vunpack.c.l.b16 %v2099
    %v2490 = vunpack.c.h.b16 %v2099
    %v2491 = vunpack.c.l.b16 %v2100
    %v2492 = vunpack.c.h.b16 %v2100
    %v2493 = vunpack.c.l.b16 %v2101
    %v2494 = vunpack.c.h.b16 %v2101
    %v2495 = vunpack.c.l.b16 %v2102
    %v2496 = vunpack.c.h.b16 %v2102
    %v2497 = vunpack.c.l.b16 %v2103
    %v2498 = vunpack.c.h.b16 %v2103
    %v2499 = vunpack.c.l.b16 %v2104
    %v2500 = vunpack.c.h.b16 %v2104
    %v2501 = vunpack.c.l.b16 %v2105
    %v2502 = vunpack.c.h.b16 %v2105
    %v2503 = vunpack.c.l.b16 %v2106
    %v2504 = vunpack.c.h.b16 %v2106
    %v2505 = vunpack.c.l.b16 %v2107
    %v2506 = vunpack.c.h.b16 %v2107
    %v2507 = vunpack.c.l.b16 %v2108
    %v2508 = vunpack.c.h.b16 %v2108
    %v2509 = vunpack.c.l.b16 %v2109
    %v2510 = vunpack.c.h.b16 %v2109
    %v2511 = vunpack.c.l.b16 %v2110
    %v2512 = vunpack.c.h.b16 %v2110
    %v2513 = vunpack.c.l.b16 %v2111
    %v2514 = vunpack.c.h.b16 %v2111
    %v2515 = vunpack.c.l.b16 %v2112
    %v2516 = vunpack.c.h.b16 %v2112
    %v2517 = vunpack.c.l.b16 %v2113
    %v2518 = vunpack.c.h.b16 %v2113
    %v2519 = vunpack.c.l.b16 %v2114
    %v2520 = vunpack.c.h.b16 %v2114
    %v2521 = vpack.c.b16 %v2269, %v2265
    %v2522 = vpack.c.b16 %v2270, %v2266
    %v2523 = vpack.c.b16 %v2271, %v2267
    %v2524 = vpack.c.b16 %v2272, %v2268
    %v2525 = vpack.c.b16 %v2277, %v2273
    %v2526 = vpack.c.b16 %v2278, %v2274
    %v2527 = vpack.c.b16 %v2279, %v2275
    %v2528 = vpack.c.b16 %v2280, %v2276
    %v2529 = vpack.c.b16 %v2285, %v2281
    %v2530 = vpack.c.b16 %v2286, %v2282
    %v2531 = vpack.c.b16 %v2287, %v2283
    %v2532 = vpack.c.b16 %v2288, %v2284
    %v2533 = vpack.c.b16 %v2293, %v2289
    %v2534 = vpack.c.b16 %v2294, %v2290
    %v2535 = vpack.c.b16 %v2295, %v2291
    %v2536 = vpack.c.b16 %v2296, %v2292
    %v2537 = vpack.c.b16 %v2301, %v2297
    %v2538 = vpack.c.b16 %v2302, %v2298
    %v2539 = vpack.c.b16 %v2303, %v2299
    %v2540 = vpack.c.b16 %v2304, %v2300
    %v2541 = vpack.c.b16 %v2309, %v2305
    %v2542 = vpack.c.b16 %v2310, %v2306
    %v2543 = vpack.c.b16 %v2311, %v2307
    %v2544 = vpack.c.b16 %v2312, %v2308
    %v2545 = vpack.c.b16 %v2317, %v2313
    %v2546 = vpack.c.b16 %v2318, %v2314
    %v2547 = vpack.c.b16 %v2319, %v2315
    %v2548 = vpack.c.b16 %v2320, %v2316
    %v2549 = vpack.c.b16 %v2325, %v2321
    %v2550 = vpack.c.b16 %v2326, %v2322
    %v2551 = vpack.c.b16 %v2327, %v2323
    %v2552 = vpack.c.b16 %v2328, %v2324
    %v2553 = vpack.c.b16 %v2333, %v2329
    %v2554 = vpack.c.b16 %v2334, %v2330
    %v2555 = vpack.c.b16 %v2335, %v2331
    %v2556 = vpack.c.b16 %v2336, %v2332
    %v2557 = vpack.c.b16 %v2341, %v2337
    %v2558 = vpack.c.b16 %v2342, %v2338
    %v2559 = vpack.c.b16 %v2343, %v2339
    %v2560 = vpack.c.b16 %v2344, %v2340
    %v2561 = vpack.c.b16 %v2349, %v2345
    %v2562 = vpack.c.b16 %v2350, %v2346
    %v2563 = vpack.c.b16 %v2351, %v2347
    %v2564 = vpack.c.b16 %v2352, %v2348
    %v2565 = vpack.c.b16 %v2357, %v2353
    %v2566 = vpack.c.b16 %v2358, %v2354
    %v2567 = vpack.c.b16 %v2359, %v2355
    %v2568 = vpack.c.b16 %v2360, %v2356
    %v2569 = vpack.c.b16 %v2365, %v2361
    %v2570 = vpack.c.b16 %v2366, %v2362
    %v2571 = vpack.c.b16 %v2367, %v2363
    %v2572 = vpack.c.b16 %v2368, %v2364
    %v2573 = vpack.c.b16 %v2373, %v2369
    %v2574 = vpack.c.b16 %v2374, %v2370
    %v2575 = vpack.c.b16 %v2375, %v2371
    %v2576 = vpack.c.b16 %v2376, %v2372
    %v2577 = vpack.c.b16 %v2381, %v2377
    %v2578 = vpack.c.b16 %v2382, %v2378
    %v2579 = vpack.c.b16 %v2383, %v2379
    %v2580 = vpack.c.b16 %v2384, %v2380
    %v2581 = vpack.c.b16 %v2389, %v2385
    %v2582 = vpack.c.b16 %v2390, %v2386
    %v2583 = vpack.c.b16 %v2391, %v2387
    %v2584 = vpack.c.b16 %v2392, %v2388
    %v2585 = vpack.c.b16 %v2397, %v2393
    %v2586 = vpack.c.b16 %v2398, %v2394
    %v2587 = vpack.c.b16 %v2399, %v2395
    %v2588 = vpack.c.b16 %v2400, %v2396
    %v2589 = vpack.c.b16 %v2405, %v2401
    %v2590 = vpack.c.b16 %v2406, %v2402
    %v2591 = vpack.c.b16 %v2407, %v2403
    %v2592 = vpack.c.b16 %v2408, %v2404
    %v2593 = vpack.c.b16 %v2413, %v2409
    %v2594 = vpack.c.b16 %v2414, %v2410
    %v2595 = vpack.c.b16 %v2415, %v2411
    %v2596 = vpack.c.b16 %v2416, %v2412
    %v2597 = vpack.c.b16 %v2421, %v2417
    %v2598 = vpack.c.b16 %v2422, %v2418
    %v2599 = vpack.c.b16 %v2423, %v2419
    %v2600 = vpack.c.b16 %v2424, %v2420
    %v2601 = vpack.c.b16 %v2429, %v2425
    %v2602 = vpack.c.b16 %v2430, %v2426
    %v2603 = vpack.c.b16 %v2431, %v2427
    %v2604 = vpack.c.b16 %v2432, %v2428
    %v2605 = vpack.c.b16 %v2437, %v2433
    %v2606 = vpack.c.b16 %v2438, %v2434
    %v2607 = vpack.c.b16 %v2439, %v2435
    %v2608 = vpack.c.b16 %v2440, %v2436
    %v2609 = vpack.c.b16 %v2445, %v2441
    %v2610 = vpack.c.b16 %v2446, %v2442
    %v2611 = vpack.c.b16 %v2447, %v2443
    %v2612 = vpack.c.b16 %v2448, %v2444
    %v2613 = vpack.c.b16 %v2453, %v2449
    %v2614 = vpack.c.b16 %v2454, %v2450
    %v2615 = vpack.c.b16 %v2455, %v2451
    %v2616 = vpack.c.b16 %v2456, %v2452
    %v2617 = vpack.c.b16 %v2461, %v2457
    %v2618 = vpack.c.b16 %v2462, %v2458
    %v2619 = vpack.c.b16 %v2463, %v2459
    %v2620 = vpack.c.b16 %v2464, %v2460
    %v2621 = vpack.c.b16 %v2469, %v2465
    %v2622 = vpack.c.b16 %v2470, %v2466
    %v2623 = vpack.c.b16 %v2471, %v2467
    %v2624 = vpack.c.b16 %v2472, %v2468
    %v2625 = vpack.c.b16 %v2477, %v2473
    %v2626 = vpack.c.b16 %v2478, %v2474
    %v2627 = vpack.c.b16 %v2479, %v2475
    %v2628 = vpack.c.b16 %v2480, %v2476
    %v2629 = vpack.c.b16 %v2485, %v2481
    %v2630 = vpack.c.b16 %v2486, %v2482
    %v2631 = vpack.c.b16 %v2487, %v2483
    %v2632 = vpack.c.b16 %v2488, %v2484
    %v2633 = vpack.c.b16 %v2493, %v2489
    %v2634 = vpack.c.b16 %v2494, %v2490
    %v2635 = vpack.c.b16 %v2495, %v2491
    %v2636 = vpack.c.b16 %v2496, %v2492
    %v2637 = vpack.c.b16 %v2501, %v2497
    %v2638 = vpack.c.b16 %v2502, %v2498
    %v2639 = vpack.c.b16 %v2503, %v2499
    %v2640 = vpack.c.b16 %v2504, %v2500
    %v2641 = vpack.c.b16 %v2509, %v2505
    %v2642 = vpack.c.b16 %v2510, %v2506
    %v2643 = vpack.c.b16 %v2511, %v2507
    %v2644 = vpack.c.b16 %v2512, %v2508
    %v2645 = vpack.c.b16 %v2517, %v2513
    %v2646 = vpack.c.b16 %v2518, %v2514
    %v2647 = vpack.c.b16 %v2519, %v2515
    %v2648 = vpack.c.b16 %v2520, %v2516
    %2777 = vmatprep.subr.bf16.mxu0 %v2522
    %2778 = vmatpush1.bf16.msra.mxu0 %v2521
    %2779 = vmatprep.subr.bf16.mxu0 %v2526
    %2780 = vmatpush1.bf16.msra.mxu0 %v2525
    %2781 = vmatprep.subr.bf16.mxu0 %v2530
    %2782 = vmatpush1.bf16.msra.mxu0 %v2529
    %2783 = vmatprep.subr.bf16.mxu0 %v2534
    %2784 = vmatpush1.bf16.msra.mxu0 %v2533
    %2785 = vmatprep.subr.bf16.mxu0 %v2538
    %2786 = vmatpush1.bf16.msra.mxu0 %v2537
    %2787 = vmatprep.subr.bf16.mxu0 %v2542
    %2788 = vmatpush1.bf16.msra.mxu0 %v2541
    %2789 = vmatprep.subr.bf16.mxu0 %v2546
    %2790 = vmatpush1.bf16.msra.mxu0 %v2545
    %2791 = vmatprep.subr.bf16.mxu0 %v2550
    %2792 = vmatpush1.bf16.msra.mxu0 %v2549
    %2793 = vmatprep.subr.bf16.mxu0 %v2554
    %2794 = vmatpush1.bf16.msra.mxu0 %v2553
    %2795 = vmatprep.subr.bf16.mxu0 %v2558
    %2796 = vmatpush1.bf16.msra.mxu0 %v2557
    %2797 = vmatprep.subr.bf16.mxu0 %v2562
    %2798 = vmatpush1.bf16.msra.mxu0 %v2561
    %2799 = vmatprep.subr.bf16.mxu0 %v2566
    %2800 = vmatpush1.bf16.msra.mxu0 %v2565
    %2801 = vmatprep.subr.bf16.mxu0 %v2570
    %2802 = vmatpush1.bf16.msra.mxu0 %v2569
    %2803 = vmatprep.subr.bf16.mxu0 %v2574
    %2804 = vmatpush1.bf16.msra.mxu0 %v2573
    %2805 = vmatprep.subr.bf16.mxu0 %v2578
    %2806 = vmatpush1.bf16.msra.mxu0 %v2577
    %2807 = vmatprep.subr.bf16.mxu0 %v2582
    %2808 = vmatpush1.bf16.msra.mxu0 %v2581
    %2809 = vmatprep.mubr.bf16.mxu0 %v1984
    %2810 = vmatmul.mubr.bf16.gmra.mrb[0].mxu0 %v1983
    %v2811 = vpop.f32.mrb[0].mxu0
    %v2812 = vadd.f32 %v2120, %v2811
    %v2813 = vpop.f32.mrb[0].mxu0
    %v2814 = vadd.f32 %v2124, %v2813
    %v2815 = vpop.f32.mrb[0].mxu0
    %v2816 = vpop.f32.mrb[0].mxu0
    %2817 = vdwg.mxu0
    %2818 = vmatprep.subr.bf16.mxu0 %v2586
    %2819 = vmatpush1.bf16.msra.mxu0 %v2585
    %2820 = vmatprep.subr.bf16.mxu0 %v2590
    %2821 = vmatpush1.bf16.msra.mxu0 %v2589
    %2822 = vmatprep.subr.bf16.mxu0 %v2594
    %2823 = vmatpush1.bf16.msra.mxu0 %v2593
    %2824 = vmatprep.subr.bf16.mxu0 %v2598
    %2825 = vmatpush1.bf16.msra.mxu0 %v2597
    %2826 = vmatprep.subr.bf16.mxu0 %v2602
    %2827 = vmatpush1.bf16.msra.mxu0 %v2601
    %2828 = vmatprep.subr.bf16.mxu0 %v2606
    %2829 = vmatpush1.bf16.msra.mxu0 %v2605
    %2830 = vmatprep.subr.bf16.mxu0 %v2610
    %2831 = vmatpush1.bf16.msra.mxu0 %v2609
    %2832 = vmatprep.subr.bf16.mxu0 %v2614
    %2833 = vmatpush1.bf16.msra.mxu0 %v2613
    %2834 = vmatprep.subr.bf16.mxu0 %v2618
    %2835 = vmatpush1.bf16.msra.mxu0 %v2617
    %2836 = vmatprep.subr.bf16.mxu0 %v2622
    %2837 = vmatpush1.bf16.msra.mxu0 %v2621
    %2838 = vmatprep.subr.bf16.mxu0 %v2626
    %2839 = vmatpush1.bf16.msra.mxu0 %v2625
    %2840 = vmatprep.subr.bf16.mxu0 %v2630
    %2841 = vmatpush1.bf16.msra.mxu0 %v2629
    %2842 = vmatprep.subr.bf16.mxu0 %v2634
    %2843 = vmatpush1.bf16.msra.mxu0 %v2633
    %2844 = vmatprep.subr.bf16.mxu0 %v2638
    %2845 = vmatpush1.bf16.msra.mxu0 %v2637
    %2846 = vmatprep.subr.bf16.mxu0 %v2642
    %2847 = vmatpush1.bf16.msra.mxu0 %v2641
    %2848 = vmatprep.subr.bf16.mxu0 %v2646
    %2849 = vmatpush1.bf16.msra.mxu0 %v2645
    %2850 = vmatprep.mubr.bf16.mxu0 %v1986
    %2851 = vmatmul.mubr.bf16.gmra.mrb[0].mxu0 %v1985
    %v2852 = vpop.f32.mrb[0].mxu0
    %v2853 = vadd.f32 %v2812, %v2852
    %v2854 = vpop.f32.mrb[0].mxu0
    %v2855 = vadd.f32 %v2814, %v2854
    %v2856 = vpop.f32.mrb[0].mxu0
    %v2857 = vpop.f32.mrb[0].mxu0
    %2858 = vdwg.mxu0
    %2859 = vmatprep.subr.bf16.mxu0 %v2524
    %2860 = vmatpush1.bf16.msra.mxu0 %v2523
    %2861 = vmatprep.subr.bf16.mxu0 %v2528
    %2862 = vmatpush1.bf16.msra.mxu0 %v2527
    %2863 = vmatprep.subr.bf16.mxu0 %v2532
    %2864 = vmatpush1.bf16.msra.mxu0 %v2531
    %2865 = vmatprep.subr.bf16.mxu0 %v2536
    %2866 = vmatpush1.bf16.msra.mxu0 %v2535
    %2867 = vmatprep.subr.bf16.mxu0 %v2540
    %2868 = vmatpush1.bf16.msra.mxu0 %v2539
    %2869 = vmatprep.subr.bf16.mxu0 %v2544
    %2870 = vmatpush1.bf16.msra.mxu0 %v2543
    %2871 = vmatprep.subr.bf16.mxu0 %v2548
    %2872 = vmatpush1.bf16.msra.mxu0 %v2547
    %2873 = vmatprep.subr.bf16.mxu0 %v2552
    %2874 = vmatpush1.bf16.msra.mxu0 %v2551
    %2875 = vmatprep.subr.bf16.mxu0 %v2556
    %2876 = vmatpush1.bf16.msra.mxu0 %v2555
    %2877 = vmatprep.subr.bf16.mxu0 %v2560
    %2878 = vmatpush1.bf16.msra.mxu0 %v2559
    %2879 = vmatprep.subr.bf16.mxu0 %v2564
    %2880 = vmatpush1.bf16.msra.mxu0 %v2563
    %2881 = vmatprep.subr.bf16.mxu0 %v2568
    %2882 = vmatpush1.bf16.msra.mxu0 %v2567
    %2883 = vmatprep.subr.bf16.mxu0 %v2572
    %2884 = vmatpush1.bf16.msra.mxu0 %v2571
    %2885 = vmatprep.subr.bf16.mxu0 %v2576
    %2886 = vmatpush1.bf16.msra.mxu0 %v2575
    %2887 = vmatprep.subr.bf16.mxu0 %v2580
    %2888 = vmatpush1.bf16.msra.mxu0 %v2579
    %2889 = vmatprep.subr.bf16.mxu0 %v2584
    %2890 = vmatpush1.bf16.msra.mxu0 %v2583
    %2891 = vmatprep.mubr.bf16.mxu0 %v1984
    %2892 = vmatmul.mubr.bf16.gmra.mrb[0].mxu0 %v1983
    %v2893 = vpop.f32.mrb[0].mxu0
    %v2894 = vadd.f32 %v2128, %v2893
    %v2895 = vpop.f32.mrb[0].mxu0
    %v2896 = vadd.f32 %v2132, %v2895
    %v2897 = vpop.f32.mrb[0].mxu0
    %v2898 = vpop.f32.mrb[0].mxu0
    %2899 = vdwg.mxu0
    %2900 = vmatprep.subr.bf16.mxu0 %v2588
    %2901 = vmatpush1.bf16.msra.mxu0 %v2587
    %2902 = vmatprep.subr.bf16.mxu0 %v2592
    %2903 = vmatpush1.bf16.msra.mxu0 %v2591
    %2904 = vmatprep.subr.bf16.mxu0 %v2596
    %2905 = vmatpush1.bf16.msra.mxu0 %v2595
    %2906 = vmatprep.subr.bf16.mxu0 %v2600
    %2907 = vmatpush1.bf16.msra.mxu0 %v2599
    %2908 = vmatprep.subr.bf16.mxu0 %v2604
    %2909 = vmatpush1.bf16.msra.mxu0 %v2603
    %2910 = vmatprep.subr.bf16.mxu0 %v2608
    %2911 = vmatpush1.bf16.msra.mxu0 %v2607
    %2912 = vmatprep.subr.bf16.mxu0 %v2612
    %2913 = vmatpush1.bf16.msra.mxu0 %v2611
    %2914 = vmatprep.subr.bf16.mxu0 %v2616
    %2915 = vmatpush1.bf16.msra.mxu0 %v2615
    %2916 = vmatprep.subr.bf16.mxu0 %v2620
    %2917 = vmatpush1.bf16.msra.mxu0 %v2619
    %2918 = vmatprep.subr.bf16.mxu0 %v2624
    %2919 = vmatpush1.bf16.msra.mxu0 %v2623
    %2920 = vmatprep.subr.bf16.mxu0 %v2628
    %2921 = vmatpush1.bf16.msra.mxu0 %v2627
    %2922 = vmatprep.subr.bf16.mxu0 %v2632
    %2923 = vmatpush1.bf16.msra.mxu0 %v2631
    %2924 = vmatprep.subr.bf16.mxu0 %v2636
    %2925 = vmatpush1.bf16.msra.mxu0 %v2635
    %2926 = vmatprep.subr.bf16.mxu0 %v2640
    %2927 = vmatpush1.bf16.msra.mxu0 %v2639
    %2928 = vmatprep.subr.bf16.mxu0 %v2644
    %2929 = vmatpush1.bf16.msra.mxu0 %v2643
    %2930 = vmatprep.subr.bf16.mxu0 %v2648
    %2931 = vmatpush1.bf16.msra.mxu0 %v2647
    %2932 = vmatprep.mubr.bf16.mxu0 %v1986
    %2933 = vmatmul.mubr.bf16.gmra.mrb[0].mxu0 %v1985
    %v2934 = vpop.f32.mrb[0].mxu0
    %v2935 = vadd.f32 %v2894, %v2934
    %v2936 = vpop.f32.mrb[0].mxu0
    %v2937 = vadd.f32 %v2896, %v2936
    %v2938 = vpop.f32.mrb[0].mxu0
    %v2939 = vpop.f32.mrb[0].mxu0
    %2940 = vdwg.mxu0
    %v2941 = vmax.f32 %v2853, 0.0
    %v2942 = vmax.f32 %v2855, 0.0
    %v2943 = vmax.f32 %v2935, 0.0
    %v2944 = vmax.f32 %v2937, 0.0
    %v2945 = vpack.c.bf16 %v2941, %v2941
    %v2946 = vpack.c.bf16 %v2942, %v2942
    %v2947 = vpack.c.bf16 %v2943, %v2943
    %v2948 = vpack.c.bf16 %v2944, %v2944
    %v2949 = vld [vmem:[%s5] sm:$0xf]
    %v2950 = vld [vmem:[%s5 + $0x4] sm:$0xf]
    %v2951 = vld [vmem:[%s5 + $0x8] sm:$0xf]
    %v2952 = vld [vmem:[%s5 + $0xc] sm:$0xf]
    %v2953 = vld [vmem:[%s5 + $0x10] sm:$0xf]
    %v2954 = vld [vmem:[%s5 + $0x14] sm:$0xf]
    %v2955 = vld [vmem:[%s5 + $0x18] sm:$0xf]
    %v2956 = vld [vmem:[%s5 + $0x1c] sm:$0xf]
    %v2957 = vld [vmem:[%s5 + $0x20] sm:$0xf]
    %v2958 = vld [vmem:[%s5 + $0x24] sm:$0xf]
    %v2959 = vld [vmem:[%s5 + $0x28] sm:$0xf]
    %v2960 = vld [vmem:[%s5 + $0x2c] sm:$0xf]
    %v2961 = vld [vmem:[%s5 + $0x30] sm:$0xf]
    %v2962 = vld [vmem:[%s5 + $0x34] sm:$0xf]
    %v2963 = vld [vmem:[%s5 + $0x38] sm:$0xf]
    %v2964 = vld [vmem:[%s5 + $0x3c] sm:$0xf]
    %v2965 = vld [vmem:[%s5 + $0x40] sm:$0xf]
    %v2966 = vld [vmem:[%s5 + $0x44] sm:$0xf]
    %v2967 = vld [vmem:[%s5 + $0x48] sm:$0xf]
    %v2968 = vld [vmem:[%s5 + $0x4c] sm:$0xf]
    %v2969 = vld [vmem:[%s5 + $0x50] sm:$0xf]
    %v2970 = vld [vmem:[%s5 + $0x54] sm:$0xf]
    %v2971 = vld [vmem:[%s5 + $0x58] sm:$0xf]
    %v2972 = vld [vmem:[%s5 + $0x5c] sm:$0xf]
    %v2973 = vld [vmem:[%s5 + $0x60] sm:$0xf]
    %v2974 = vld [vmem:[%s5 + $0x64] sm:$0xf]
    %v2975 = vld [vmem:[%s5 + $0x68] sm:$0xf]
    %v2976 = vld [vmem:[%s5 + $0x6c] sm:$0xf]
    %v2977 = vld [vmem:[%s5 + $0x70] sm:$0xf]
    %v2978 = vld [vmem:[%s5 + $0x74] sm:$0xf]
    %v2979 = vld [vmem:[%s5 + $0x78] sm:$0xf]
    %v2980 = vld [vmem:[%s5 + $0x7c] sm:$0xf]
    %v2981 = vld [vmem:[%s5 + $0x80] sm:$0xf]
    %v2982 = vld [vmem:[%s5 + $0x84] sm:$0xf]
    %v2983 = vld [vmem:[%s5 + $0x88] sm:$0xf]
    %v2984 = vld [vmem:[%s5 + $0x8c] sm:$0xf]
    %v2985 = vld [vmem:[%s5 + $0x90] sm:$0xf]
    %v2986 = vld [vmem:[%s5 + $0x94] sm:$0xf]
    %v2987 = vld [vmem:[%s5 + $0x98] sm:$0xf]
    %v2988 = vld [vmem:[%s5 + $0x9c] sm:$0xf]
    %v2989 = vld [vmem:[%s5 + $0xa0] sm:$0xf]
    %v2990 = vld [vmem:[%s5 + $0xa4] sm:$0xf]
    %v2991 = vld [vmem:[%s5 + $0xa8] sm:$0xf]
    %v2992 = vld [vmem:[%s5 + $0xac] sm:$0xf]
    %v2993 = vld [vmem:[%s5 + $0xb0] sm:$0xf]
    %v2994 = vld [vmem:[%s5 + $0xb4] sm:$0xf]
    %v2995 = vld [vmem:[%s5 + $0xb8] sm:$0xf]
    %v2996 = vld [vmem:[%s5 + $0xbc] sm:$0xf]
    %v2997 = vld [vmem:[%s5 + $0xc0] sm:$0xf]
    %v2998 = vld [vmem:[%s5 + $0xc4] sm:$0xf]
    %v2999 = vld [vmem:[%s5 + $0xc8] sm:$0xf]
    %v3000 = vld [vmem:[%s5 + $0xcc] sm:$0xf]
    %v3001 = vld [vmem:[%s5 + $0xd0] sm:$0xf]
    %v3002 = vld [vmem:[%s5 + $0xd4] sm:$0xf]
    %v3003 = vld [vmem:[%s5 + $0xd8] sm:$0xf]
    %v3004 = vld [vmem:[%s5 + $0xdc] sm:$0xf]
    %v3005 = vld [vmem:[%s5 + $0xe0] sm:$0xf]
    %v3006 = vld [vmem:[%s5 + $0xe4] sm:$0xf]
    %v3007 = vld [vmem:[%s5 + $0xe8] sm:$0xf]
    %v3008 = vld [vmem:[%s5 + $0xec] sm:$0xf]
    %v3009 = vld [vmem:[%s5 + $0xf0] sm:$0xf]
    %v3010 = vld [vmem:[%s5 + $0xf4] sm:$0xf]
    %v3011 = vld [vmem:[%s5 + $0xf8] sm:$0xf]
    %v3012 = vld [vmem:[%s5 + $0xfc] sm:$0xf]
    %v3013 = vld [vmem:[%s6] sm:$0x1]
    %v3015 = vlaneseq
    %v3016 = vshrl.u32 %v3015, 7
    %v3017 = vsub.s32 0, %v3016
    %v3018 = vrot.slane %v3013, %v3017
    %v3084 = vunpack.c.l.b16 %v2949
    %v3085 = vunpack.c.l.b16 %v2950
    %v3086 = vunpack.c.l.b16 %v2951
    %v3087 = vunpack.c.l.b16 %v2952
    %v3088 = vunpack.c.l.b16 %v2953
    %v3089 = vunpack.c.l.b16 %v2954
    %v3090 = vunpack.c.l.b16 %v2955
    %v3091 = vunpack.c.l.b16 %v2956
    %v3092 = vunpack.c.l.b16 %v2957
    %v3093 = vunpack.c.l.b16 %v2958
    %v3094 = vunpack.c.l.b16 %v2959
    %v3095 = vunpack.c.l.b16 %v2960
    %v3096 = vunpack.c.l.b16 %v2961
    %v3097 = vunpack.c.l.b16 %v2962
    %v3098 = vunpack.c.l.b16 %v2963
    %v3099 = vunpack.c.l.b16 %v2964
    %v3100 = vunpack.c.l.b16 %v2965
    %v3101 = vunpack.c.l.b16 %v2966
    %v3102 = vunpack.c.l.b16 %v2967
    %v3103 = vunpack.c.l.b16 %v2968
    %v3104 = vunpack.c.l.b16 %v2969
    %v3105 = vunpack.c.l.b16 %v2970
    %v3106 = vunpack.c.l.b16 %v2971
    %v3107 = vunpack.c.l.b16 %v2972
    %v3108 = vunpack.c.l.b16 %v2973
    %v3109 = vunpack.c.l.b16 %v2974
    %v3110 = vunpack.c.l.b16 %v2975
    %v3111 = vunpack.c.l.b16 %v2976
    %v3112 = vunpack.c.l.b16 %v2977
    %v3113 = vunpack.c.l.b16 %v2978
    %v3114 = vunpack.c.l.b16 %v2979
    %v3115 = vunpack.c.l.b16 %v2980
    %v3116 = vunpack.c.l.b16 %v2981
    %v3117 = vunpack.c.l.b16 %v2982
    %v3118 = vunpack.c.l.b16 %v2983
    %v3119 = vunpack.c.l.b16 %v2984
    %v3120 = vunpack.c.l.b16 %v2985
    %v3121 = vunpack.c.l.b16 %v2986
    %v3122 = vunpack.c.l.b16 %v2987
    %v3123 = vunpack.c.l.b16 %v2988
    %v3124 = vunpack.c.l.b16 %v2989
    %v3125 = vunpack.c.l.b16 %v2990
    %v3126 = vunpack.c.l.b16 %v2991
    %v3127 = vunpack.c.l.b16 %v2992
    %v3128 = vunpack.c.l.b16 %v2993
    %v3129 = vunpack.c.l.b16 %v2994
    %v3130 = vunpack.c.l.b16 %v2995
    %v3131 = vunpack.c.l.b16 %v2996
    %v3132 = vunpack.c.l.b16 %v2997
    %v3133 = vunpack.c.l.b16 %v2998
    %v3134 = vunpack.c.l.b16 %v2999
    %v3135 = vunpack.c.l.b16 %v3000
    %v3136 = vunpack.c.l.b16 %v3001
    %v3137 = vunpack.c.l.b16 %v3002
    %v3138 = vunpack.c.l.b16 %v3003
    %v3139 = vunpack.c.l.b16 %v3004
    %v3140 = vunpack.c.l.b16 %v3005
    %v3141 = vunpack.c.l.b16 %v3006
    %v3142 = vunpack.c.l.b16 %v3007
    %v3143 = vunpack.c.l.b16 %v3008
    %v3144 = vunpack.c.l.b16 %v3009
    %v3145 = vunpack.c.l.b16 %v3010
    %v3146 = vunpack.c.l.b16 %v3011
    %v3147 = vunpack.c.l.b16 %v3012
    %v3148 = vpack.c.b16 %v3085, %v3084
    %v3149 = vpack.c.b16 %v3087, %v3086
    %v3150 = vpack.c.b16 %v3089, %v3088
    %v3151 = vpack.c.b16 %v3091, %v3090
    %v3152 = vpack.c.b16 %v3093, %v3092
    %v3153 = vpack.c.b16 %v3095, %v3094
    %v3154 = vpack.c.b16 %v3097, %v3096
    %v3155 = vpack.c.b16 %v3099, %v3098
    %v3156 = vpack.c.b16 %v3101, %v3100
    %v3157 = vpack.c.b16 %v3103, %v3102
    %v3158 = vpack.c.b16 %v3105, %v3104
    %v3159 = vpack.c.b16 %v3107, %v3106
    %v3160 = vpack.c.b16 %v3109, %v3108
    %v3161 = vpack.c.b16 %v3111, %v3110
    %v3162 = vpack.c.b16 %v3113, %v3112
    %v3163 = vpack.c.b16 %v3115, %v3114
    %v3164 = vpack.c.b16 %v3117, %v3116
    %v3165 = vpack.c.b16 %v3119, %v3118
    %v3166 = vpack.c.b16 %v3121, %v3120
    %v3167 = vpack.c.b16 %v3123, %v3122
    %v3168 = vpack.c.b16 %v3125, %v3124
    %v3169 = vpack.c.b16 %v3127, %v3126
    %v3170 = vpack.c.b16 %v3129, %v3128
    %v3171 = vpack.c.b16 %v3131, %v3130
    %v3172 = vpack.c.b16 %v3133, %v3132
    %v3173 = vpack.c.b16 %v3135, %v3134
    %v3174 = vpack.c.b16 %v3137, %v3136
    %v3175 = vpack.c.b16 %v3139, %v3138
    %v3176 = vpack.c.b16 %v3141, %v3140
    %v3177 = vpack.c.b16 %v3143, %v3142
    %v3178 = vpack.c.b16 %v3145, %v3144
    %v3179 = vpack.c.b16 %v3147, %v3146
    %3212 = vmatprep.subr.bf16.mxu0 0
    %3213 = vmatpush1.bf16.msra.mxu0 %v3148
    %3214 = vmatprep.subr.bf16.mxu0 0
    %3215 = vmatpush1.bf16.msra.mxu0 %v3149
    %3216 = vmatprep.subr.bf16.mxu0 0
    %3217 = vmatpush1.bf16.msra.mxu0 %v3150
    %3218 = vmatprep.subr.bf16.mxu0 0
    %3219 = vmatpush1.bf16.msra.mxu0 %v3151
    %3220 = vmatprep.subr.bf16.mxu0 0
    %3221 = vmatpush1.bf16.msra.mxu0 %v3152
    %3222 = vmatprep.subr.bf16.mxu0 0
    %3223 = vmatpush1.bf16.msra.mxu0 %v3153
    %3224 = vmatprep.subr.bf16.mxu0 0
    %3225 = vmatpush1.bf16.msra.mxu0 %v3154
    %3226 = vmatprep.subr.bf16.mxu0 0
    %3227 = vmatpush1.bf16.msra.mxu0 %v3155
    %3228 = vmatprep.subr.bf16.mxu0 0
    %3229 = vmatpush1.bf16.msra.mxu0 %v3156
    %3230 = vmatprep.subr.bf16.mxu0 0
    %3231 = vmatpush1.bf16.msra.mxu0 %v3157
    %3232 = vmatprep.subr.bf16.mxu0 0
    %3233 = vmatpush1.bf16.msra.mxu0 %v3158
    %3234 = vmatprep.subr.bf16.mxu0 0
    %3235 = vmatpush1.bf16.msra.mxu0 %v3159
    %3236 = vmatprep.subr.bf16.mxu0 0
    %3237 = vmatpush1.bf16.msra.mxu0 %v3160
    %3238 = vmatprep.subr.bf16.mxu0 0
    %3239 = vmatpush1.bf16.msra.mxu0 %v3161
    %3240 = vmatprep.subr.bf16.mxu0 0
    %3241 = vmatpush1.bf16.msra.mxu0 %v3162
    %3242 = vmatprep.subr.bf16.mxu0 0
    %3243 = vmatpush1.bf16.msra.mxu0 %v3163
    %3244 = vmatprep.mubr.bf16.mxu0 %v2946
    %3245 = vmatmul.mubr.bf16.gmra.mrb[0].mxu0 %v2945
    %v3246 = vpop.f32.mrb[0].mxu0
    %v3247 = vadd.f32 %v3018, %v3246
    %v3248 = vpop.f32.mrb[0].mxu0
    %v3249 = vpop.f32.mrb[0].mxu0
    %v3250 = vpop.f32.mrb[0].mxu0
    %3251 = vdwg.mxu0
    %3252 = vmatprep.subr.bf16.mxu0 0
    %3253 = vmatpush1.bf16.msra.mxu0 %v3164
    %3254 = vmatprep.subr.bf16.mxu0 0
    %3255 = vmatpush1.bf16.msra.mxu0 %v3165
    %3256 = vmatprep.subr.bf16.mxu0 0
    %3257 = vmatpush1.bf16.msra.mxu0 %v3166
    %3258 = vmatprep.subr.bf16.mxu0 0
    %3259 = vmatpush1.bf16.msra.mxu0 %v3167
    %3260 = vmatprep.subr.bf16.mxu0 0
    %3261 = vmatpush1.bf16.msra.mxu0 %v3168
    %3262 = vmatprep.subr.bf16.mxu0 0
    %3263 = vmatpush1.bf16.msra.mxu0 %v3169
    %3264 = vmatprep.subr.bf16.mxu0 0
    %3265 = vmatpush1.bf16.msra.mxu0 %v3170
    %3266 = vmatprep.subr.bf16.mxu0 0
    %3267 = vmatpush1.bf16.msra.mxu0 %v3171
    %3268 = vmatprep.subr.bf16.mxu0 0
    %3269 = vmatpush1.bf16.msra.mxu0 %v3172
    %3270 = vmatprep.subr.bf16.mxu0 0
    %3271 = vmatpush1.bf16.msra.mxu0 %v3173
    %3272 = vmatprep.subr.bf16.mxu0 0
    %3273 = vmatpush1.bf16.msra.mxu0 %v3174
    %3274 = vmatprep.subr.bf16.mxu0 0
    %3275 = vmatpush1.bf16.msra.mxu0 %v3175
    %3276 = vmatprep.subr.bf16.mxu0 0
    %3277 = vmatpush1.bf16.msra.mxu0 %v3176
    %3278 = vmatprep.subr.bf16.mxu0 0
    %3279 = vmatpush1.bf16.msra.mxu0 %v3177
    %3280 = vmatprep.subr.bf16.mxu0 0
    %3281 = vmatpush1.bf16.msra.mxu0 %v3178
    %3282 = vmatprep.subr.bf16.mxu0 0
    %3283 = vmatpush1.bf16.msra.mxu0 %v3179
    %3284 = vmatprep.mubr.bf16.mxu0 %v2948
    %3285 = vmatmul.mubr.bf16.gmra.mrb[0].mxu0 %v2947
    %v3286 = vpop.f32.mrb[0].mxu0
    %v3287 = vadd.f32 %v3247, %v3286
    %v3288 = vpop.f32.mrb[0].mxu0
    %v3289 = vpop.f32.mrb[0].mxu0
    %v3290 = vpop.f32.mrb[0].mxu0
    %3291 = vdwg.mxu0
    %v3292 = vmax.f32 %v3287, 0.0
    %v3293 = vpack.c.bf16 %v3292, %v3292
    %v3294 = vld [vmem:[%s7] sm:$0xf]
    %v3295 = vld [vmem:[%s7 + $0x4] sm:$0xf]
    %v3296 = vld [vmem:[%s7 + $0x8] sm:$0xf]
    %v3297 = vld [vmem:[%s7 + $0xc] sm:$0xf]
    %v3298 = vld [vmem:[%s7 + $0x10] sm:$0xf]
    %v3299 = vld [vmem:[%s7 + $0x14] sm:$0xf]
    %v3300 = vld [vmem:[%s7 + $0x18] sm:$0xf]
    %v3301 = vld [vmem:[%s7 + $0x1c] sm:$0xf]
    %v3302 = vld [vmem:[%s7 + $0x20] sm:$0xf]
    %v3303 = vld [vmem:[%s7 + $0x24] sm:$0xf]
    %v3304 = vld [vmem:[%s7 + $0x28] sm:$0xf]
    %v3305 = vld [vmem:[%s7 + $0x2c] sm:$0xf]
    %v3306 = vld [vmem:[%s7 + $0x30] sm:$0xf]
    %v3307 = vld [vmem:[%s7 + $0x34] sm:$0xf]
    %v3308 = vld [vmem:[%s7 + $0x38] sm:$0xf]
    %v3309 = vld [vmem:[%s7 + $0x3c] sm:$0xf]
    %v3310 = vld [vmem:[%s8] sm:$0x1]
    %v3312 = vlaneseq
    %v3313 = vshrl.u32 %v3312, 7
    %v3314 = vsub.s32 0, %v3313
    %v3315 = vrot.slane %v3310, %v3314
    %v3333 = vunpack.c.l.b16 %v3294
    %v3334 = vunpack.c.l.b16 %v3295
    %v3335 = vunpack.c.l.b16 %v3296
    %v3336 = vunpack.c.l.b16 %v3297
    %v3337 = vunpack.c.l.b16 %v3298
    %v3338 = vunpack.c.l.b16 %v3299
    %v3339 = vunpack.c.l.b16 %v3300
    %v3340 = vunpack.c.l.b16 %v3301
    %v3341 = vunpack.c.l.b16 %v3302
    %v3342 = vunpack.c.l.b16 %v3303
    %v3343 = vunpack.c.l.b16 %v3304
    %v3344 = vunpack.c.l.b16 %v3305
    %v3345 = vunpack.c.l.b16 %v3306
    %v3346 = vunpack.c.l.b16 %v3307
    %v3347 = vunpack.c.l.b16 %v3308
    %v3348 = vunpack.c.l.b16 %v3309
    %v3349 = vpack.c.b16 %v3334, %v3333
    %v3350 = vpack.c.b16 %v3336, %v3335
    %v3351 = vpack.c.b16 %v3338, %v3337
    %v3352 = vpack.c.b16 %v3340, %v3339
    %v3353 = vpack.c.b16 %v3342, %v3341
    %v3354 = vpack.c.b16 %v3344, %v3343
    %v3355 = vpack.c.b16 %v3346, %v3345
    %v3356 = vpack.c.b16 %v3348, %v3347
    %3365 = vmatprep.subr.bf16.mxu0 0
    %3366 = vmatpush1.bf16.msra.mxu0 %v3349
    %3367 = vmatprep.subr.bf16.mxu0 0
    %3368 = vmatpush1.bf16.msra.mxu0 %v3350
    %3369 = vmatprep.subr.bf16.mxu0 0
    %3370 = vmatpush1.bf16.msra.mxu0 %v3351
    %3371 = vmatprep.subr.bf16.mxu0 0
    %3372 = vmatpush1.bf16.msra.mxu0 %v3352
    %3373 = vmatprep.subr.bf16.mxu0 0
    %3374 = vmatpush1.bf16.msra.mxu0 %v3353
    %3375 = vmatprep.subr.bf16.mxu0 0
    %3376 = vmatpush1.bf16.msra.mxu0 %v3354
    %3377 = vmatprep.subr.bf16.mxu0 0
    %3378 = vmatpush1.bf16.msra.mxu0 %v3355
    %3379 = vmatprep.subr.bf16.mxu0 0
    %3380 = vmatpush1.bf16.msra.mxu0 %v3356
    %3381 = vmatprep.subr.bf16.mxu0 0
    %3382 = vmatpush1.bf16.msra.mxu0 0
    %3383 = vmatprep.subr.bf16.mxu0 0
    %3384 = vmatpush1.bf16.msra.mxu0 0
    %3385 = vmatprep.subr.bf16.mxu0 0
    %3386 = vmatpush1.bf16.msra.mxu0 0
    %3387 = vmatprep.subr.bf16.mxu0 0
    %3388 = vmatpush1.bf16.msra.mxu0 0
    %3389 = vmatprep.subr.bf16.mxu0 0
    %3390 = vmatpush1.bf16.msra.mxu0 0
    %3391 = vmatprep.subr.bf16.mxu0 0
    %3392 = vmatpush1.bf16.msra.mxu0 0
    %3393 = vmatprep.subr.bf16.mxu0 0
    %3394 = vmatpush1.bf16.msra.mxu0 0
    %3395 = vmatprep.subr.bf16.mxu0 0
    %3396 = vmatpush1.bf16.msra.mxu0 0
    %3397 = vmatprep.mubr.bf16.mxu0 0
    %3398 = vmatmul.mubr.bf16.gmra.mrb[0].mxu0 %v3293
    %v3399 = vpop.f32.mrb[0].mxu0
    %v3400 = vadd.f32 %v3315, %v3399
    %v3401 = vpop.f32.mrb[0].mxu0
    %v3402 = vpop.f32.mrb[0].mxu0
    %v3403 = vpop.f32.mrb[0].mxu0
    %3404 = vdwg.mxu0
    %3406 = vset.pattern.permute.xlu0 6
    %3407 = vperm.xlu0 %3406, %v3400
    %v3408 = vpop.permute.xlu0 %3407
    %v3410 = vadd.f32 %v3408, %v3400
    %vm3411 = vcmask 48128
    %v3412 = vsel %vm3411, %v3400, 0.0
    %3413 = vadd.xlane.f32.xlu0 %v3412
    %v3414 = vpop.xlane.xlu0 %3413
    %v3415 = vrcp.pop 6.0
    %v3416 = vmul.f32 %v3414, %v3415
    %v3417 = vsub.f32 %v3410, %v3416
    %3418 = vst.msk [vmem:[%s9] sm:$0xff] %vm3411, %v3417
    // Predicated region
    $region46: #{dueling_convnet_forward.1} parent=1 // pred_check
      _
    $region47: #{dueling_convnet_forward.1} parent=1 // pred_check_branch
      %3420 = sbr.rel (0) target = $region49
    $region48: #{dueling_convnet_forward.1} parent=1 // pred_region
      _
    $region49: #{dueling_convnet_forward.1} parent=1 // pred_fallthru
      _
    // Predicated region
    $region50: #{dueling_convnet_forward.1} parent=1 // pred_check
      _
    $region51: #{dueling_convnet_forward.1} parent=1 // pred_check_branch
      %3422 = sbr.rel (0) target = $region53
    $region52: #{dueling_convnet_forward.1} parent=1 // pred_region
      _
    $region53: #{dueling_convnet_forward.1} parent=1 // pred_fallthru
      _
    %3423 = vsyncpa [#allocation3], 1
    %3424 = vsyncpa [#allocation5], 1

</llo_original>
